<compile_context>
chip_gen: v7x
topology: tpu7x:2x2x1
jax: 0.10.0
libtpu: 0.0.40
codegen_flags: <defaults>
</compile_context>

<pallas_src>
import functools

import jax
import jax.numpy as jnp
from jax.experimental import pallas as pl
from jax.experimental.pallas import tpu as pltpu

_CFG = [(64, 3, 1), (128, 8, 2), (256, 36, 2), (512, 3, 2)]   # ResNet-152: [3, 8, 36, 3]
_VMEM_LIMIT = 48 * 1024 * 1024          # below 64 MiB/TC physical on v7x
_TILE_BUDGET = 36 * 1024 * 1024         # cap on per-call tile footprint


def _round_up(x, m):
    return (x + m - 1) // m * m


# -----------------------------------------------------------------------------
# Pallas kernels
# -----------------------------------------------------------------------------
def _mm_bn_kernel(a_ref, b_ref, s_ref, c_ref, o_ref, acc_ref, *, relu):
    """C = A @ B (bf16 operands, f32 acc), per-column scale/bias, optional ReLU."""
    kk = pl.program_id(2)

    @pl.when(kk == 0)
    def _():
        acc_ref[...] = jnp.zeros_like(acc_ref)

    acc_ref[...] += jnp.dot(a_ref[...], b_ref[...],
                            preferred_element_type=jnp.float32)

    @pl.when(kk == pl.num_programs(2) - 1)
    def _():
        y = acc_ref[...] * s_ref[...] + c_ref[...]
        if relu:
            y = jnp.maximum(y, 0.0)
        o_ref[...] = y.astype(o_ref.dtype)


def _mm_bn_res_kernel(a_ref, b_ref, s_ref, c_ref, r_ref, o_ref, acc_ref, *, relu):
    """Same as above with a fused residual add before the ReLU."""
    kk = pl.program_id(2)

    @pl.when(kk == 0)
    def _():
        acc_ref[...] = jnp.zeros_like(acc_ref)

    acc_ref[...] += jnp.dot(a_ref[...], b_ref[...],
                            preferred_element_type=jnp.float32)

    @pl.when(kk == pl.num_programs(2) - 1)
    def _():
        y = acc_ref[...] * s_ref[...] + c_ref[...] + r_ref[...].astype(jnp.float32)
        if relu:
            y = jnp.maximum(y, 0.0)
        o_ref[...] = y.astype(o_ref.dtype)


def _conv3x3_kernel(*refs, th, wo, relu):
    """3x3 stride-1 conv + folded BN (+ReLU); 9 taps gathered in-kernel.

    refs = th+2 single-row views of the padded activation (1,1,W+2,C),
           weight (3,3,C,cout), scale (1,cout), bias (1,cout), out (1,th,W,cout).
    """
    x_refs = refs[:th + 2]
    w_ref, s_ref, c_ref, o_ref = refs[th + 2:th + 6]
    s = s_ref[...]
    c = c_ref[...]
    for r in range(th):
        acc = jnp.zeros((wo, o_ref.shape[-1]), jnp.float32)
        for i in range(3):
            for j in range(3):
                a = x_refs[r + i][0, 0, j:j + wo, :]          # (W, C) bf16
                acc += jnp.dot(a, w_ref[i, j],
                               preferred_element_type=jnp.float32)
        y = acc * s + c
        if relu:
            y = jnp.maximum(y, 0.0)
        o_ref[0, r] = y.astype(o_ref.dtype)


def _max3_kernel(a_ref, b_ref, c_ref, o_ref):
    o_ref[...] = jnp.maximum(jnp.maximum(a_ref[...], b_ref[...]), c_ref[...])


def _avgpool_kernel(x_ref, o_ref):
    o_ref[...] = jnp.mean(x_ref[...].astype(jnp.float32), axis=1, keepdims=True)


# -----------------------------------------------------------------------------
# GEMM tile selection
# -----------------------------------------------------------------------------
def _pad_k(k):
    # Keep K when already lane-aligned (1x1 convs, stride-2 3x3 im2col) or tiny;
    # otherwise round to a 256 multiple (stem 147 -> 256) for full MXU slices.
    if k % 128 == 0 or k <= 64:
        return k
    return _round_up(k, 256)


def _gemm_tiles(m, k, cout):
    kp = _pad_k(k)
    if m <= 256:
        # Deep-layer shapes: one grid step (split cout for megacore when big).
        tm = _round_up(m, 16)
        tn = cout // 2 if cout >= 512 else cout
        tk = kp
    else:
        if m >= 4096:
            tm = 1024
        elif m >= 2048:
            tm = 512
        else:
            tm = _round_up(m, 128)
        tn = cout if cout <= 512 else 512
        tk = kp if kp <= 2304 else 2304

    def _fp(tm_, tk_, tn_):   # double-buffered bf16 A/B/out + f32 acc
        return 2 * (tm_ * tk_ + tk_ * tn_ + tm_ * tn_) * 2 + tm_ * tn_ * 4

    # v7x VMEM cap (64 MiB/TC): shrink tm, then tk, then tn until it fits.
    while _fp(tm, tk, tn) > _TILE_BUDGET and tm >= 512 and tm % 512 == 0:
        tm //= 2
    while (_fp(tm, tk, tn) > _TILE_BUDGET and tk % 256 == 0 and tk > 256
           and kp % (tk // 2) == 0):
        tk //= 2
    while _fp(tm, tk, tn) > _TILE_BUDGET and tn % 256 == 0 and tn > 256:
        tn //= 2

    mp = _round_up(m, tm)
    np_ = _round_up(cout, tn)
    return tm, mp, tk, kp, tn, np_


# -----------------------------------------------------------------------------
# Convolutions
# -----------------------------------------------------------------------------
def _im2col(x, k, stride, pad):
    n, h, w, c = x.shape
    xp = jnp.pad(x, ((0, 0), (pad, pad), (pad, pad), (0, 0)))
    ho = (h + 2 * pad - k) // stride + 1
    wo = (w + 2 * pad - k) // stride + 1
    cols = [xp[:, i:i + stride * ho:stride, j:j + stride * wo:stride, :]
            for i in range(k) for j in range(k)]
    patches = jnp.concatenate(cols, axis=-1)
    return patches.reshape(n * ho * wo, k * k * c), ho, wo


def conv_bn_gemm(x, p, *, k, stride, pad, relu=True, residual=None):
    """Conv as a GEMM + folded BN (+residual) (+ReLU).

    Used for 1x1 convs, the 7x7 stem and the three stride-2 3x3 convs.
    Stride-1 3x3 convs take the im2col-free path in conv3x3_bn below.
    """
    n = x.shape[0]
    cin = x.shape[-1]
    cout = p["w"].shape[-1]
    kdim = k * k * cin

    if k == 1:
        xs = x if stride == 1 else x[:, ::stride, ::stride, :]
        ho, wo = xs.shape[1], xs.shape[2]
        a = xs.reshape(n * ho * wo, cin)
    else:
        a, ho, wo = _im2col(x, k, stride, pad)

    m = a.shape[0]
    tm, mp, tk, kp, tn, np_ = _gemm_tiles(m, kdim, cout)
    assert kp == p["w"].shape[0], "pre-packed weight K mismatch"

    a = a.astype(jnp.bfloat16)
    if mp != m or kp != kdim:
        a = jnp.pad(a, ((0, mp - m), (0, kp - kdim)))

    args = [a, p["w"], p["scale"], p["bias"]]
    in_specs = [
        pl.BlockSpec((tm, tk), lambda i, j, kk: (i, kk)),
        pl.BlockSpec((tk, tn), lambda i, j, kk: (kk, j)),
        pl.BlockSpec((1, tn), lambda i, j, kk: (0, j)),
        pl.BlockSpec((1, tn), lambda i, j, kk: (0, j)),
    ]
    if residual is not None:
        r = residual.reshape(m, cout).astype(jnp.bfloat16)
        if mp != m:
            r = jnp.pad(r, ((0, mp - m), (0, 0)))
        args.append(r)
        in_specs.append(pl.BlockSpec((tm, tn), lambda i, j, kk: (i, j)))
        kernel = functools.partial(_mm_bn_res_kernel, relu=relu)
    else:
        kernel = functools.partial(_mm_bn_kernel, relu=relu)

    out = pl.pallas_call(
        kernel,
        out_shape=jax.ShapeDtypeStruct((mp, np_), jnp.bfloat16),
        grid_spec=pltpu.PrefetchScalarGridSpec(
            num_scalar_prefetch=0,
            grid=(mp // tm, np_ // tn, kp // tk),
            in_specs=in_specs,
            out_specs=pl.BlockSpec((tm, tn), lambda i, j, kk: (i, j)),
            scratch_shapes=[pltpu.VMEM((tm, tn), jnp.float32)],
        ),
        compiler_params=pltpu.CompilerParams(
            dimension_semantics=("parallel", "parallel", "arbitrary"),
            vmem_limit_bytes=_VMEM_LIMIT,
        ),
    )(*args)

    if mp != m or np_ != cout:
        out = out[:m, :cout]
    return out.reshape(n, ho, wo, cout)


def conv3x3_bn(x, p, *, relu=True):
    """3x3 stride-1 pad-1 conv + folded BN (+ReLU), im2col-free.

    The padded activation is passed th+2 times with single-row BlockSpecs whose
    index_maps select the vertically shifted rows; horizontal taps are static
    slices inside the kernel (9 shifted 1x1 GEMMs accumulated in f32).
    """
    n, h, w, cin = x.shape
    cout = p["w"].shape[-1]
    xp = jnp.pad(x.astype(jnp.bfloat16), ((0, 0), (1, 1), (1, 1), (0, 0)))

    th = 1
    for cand in (8, 7, 6, 5, 4, 3, 2):
        if h % cand == 0:
            th = cand
            break

    x_specs = [
        pl.BlockSpec((1, 1, w + 2, cin),
                     lambda b, hb, t=t, th=th: (b, hb * th + t, 0, 0))
        for t in range(th + 2)
    ]
    in_specs = x_specs + [
        pl.BlockSpec((3, 3, cin, cout), lambda b, hb: (0, 0, 0, 0)),
        pl.BlockSpec((1, cout), lambda b, hb: (0, 0)),
        pl.BlockSpec((1, cout), lambda b, hb: (0, 0)),
    ]
    out = pl.pallas_call(
        functools.partial(_conv3x3_kernel, th=th, wo=w, relu=relu),
        out_shape=jax.ShapeDtypeStruct((n, h, w, cout), jnp.bfloat16),
        grid_spec=pltpu.PrefetchScalarGridSpec(
            num_scalar_prefetch=0,
            grid=(n, h // th),
            in_specs=in_specs,
            out_specs=pl.BlockSpec((1, th, w, cout), lambda b, hb: (b, hb, 0, 0)),
        ),
        compiler_params=pltpu.CompilerParams(
            dimension_semantics=("parallel", "parallel"),
            vmem_limit_bytes=_VMEM_LIMIT,
        ),
    )(*([xp] * (th + 2) + [p["w"], p["scale"], p["bias"]]))
    return out


# -----------------------------------------------------------------------------
# Pooling
# -----------------------------------------------------------------------------
def maxpool_3x3_s2(x):
    n, hs, ws, c = x.shape
    ho = (hs - 1) // 2 + 1
    wo = (ws - 1) // 2 + 1

    # Pass A: 3-tap max along H (stride 2). Taps are taken straight from x via
    # clamped index_maps (clamping duplicates an in-window row, harmless for max),
    # so no padded / shifted copies are written to HBM.
    def _h_spec(i):
        return pl.BlockSpec(
            (1, 1, ws, c),
            lambda b, h, i=i: (b, jnp.clip(2 * h - 1 + i, 0, hs - 1), 0, 0))

    out1 = pl.pallas_call(
        _max3_kernel,
        out_shape=jax.ShapeDtypeStruct((n, ho, ws, c), x.dtype),
        grid_spec=pltpu.PrefetchScalarGridSpec(
            num_scalar_prefetch=0,
            grid=(n, ho),
            in_specs=[_h_spec(0), _h_spec(1), _h_spec(2)],
            out_specs=pl.BlockSpec((1, 1, ws, c), lambda b, h: (b, h, 0, 0)),
        ),
        compiler_params=pltpu.CompilerParams(
            dimension_semantics=("parallel", "parallel"),
            vmem_limit_bytes=_VMEM_LIMIT,
        ),
    )(x, x, x)

    # Pass B: 3-tap max along W (stride 2) on the already-halved tensor,
    # reduced by a lane-dense Pallas kernel (last dim a multiple of 128).
    widx = jnp.arange(wo)
    taps = [jnp.take(out1, jnp.clip(2 * widx - 1 + j, 0, ws - 1), axis=2)
            for j in range(3)]
    if (ho % 8 == 0) and ((wo * c) % 128 == 0):
        shape2d, blk, grid = (n * ho, wo * c), (ho, wo * c), (n,)
    else:
        shape2d, blk, grid = (n * ho * wo, c), (n * ho * wo, c), (1,)
    taps2d = [t.reshape(shape2d) for t in taps]

    out = pl.pallas_call(
        _max3_kernel,
        out_shape=jax.ShapeDtypeStruct(shape2d, x.dtype),
        grid_spec=pltpu.PrefetchScalarGridSpec(
            num_scalar_prefetch=0,
            grid=grid,
            in_specs=[pl.BlockSpec(blk, lambda i: (i, 0))] * 3,
            out_specs=pl.BlockSpec(blk, lambda i: (i, 0)),
        ),
        compiler_params=pltpu.CompilerParams(
            dimension_semantics=("parallel",),
            vmem_limit_bytes=_VMEM_LIMIT,
        ),
    )(*taps2d)
    return out.reshape(n, ho, wo, c)


def global_avgpool(x):
    n, h, w, c = x.shape
    xr = x.reshape(n, h * w, c)
    out = pl.pallas_call(
        _avgpool_kernel,
        out_shape=jax.ShapeDtypeStruct((n, 1, c), jnp.float32),
        grid_spec=pltpu.PrefetchScalarGridSpec(
            num_scalar_prefetch=0,
            grid=(n,),
            in_specs=[pl.BlockSpec((1, h * w, c), lambda i: (i, 0, 0))],
            out_specs=pl.BlockSpec((1, 1, c), lambda i: (i, 0, 0)),
        ),
        compiler_params=pltpu.CompilerParams(
            dimension_semantics=("parallel",),
            vmem_limit_bytes=_VMEM_LIMIT,
        ),
    )(xr)
    return out.reshape(n, c)


# -----------------------------------------------------------------------------
# Deterministic, pre-packed parameters (ResNet-152 topology)
# -----------------------------------------------------------------------------
def _init_bn(key, c):
    k1, k2, k3, k4 = jax.random.split(key, 4)
    gamma = 1.0 + 0.1 * jax.random.normal(k1, (c,), jnp.float32)
    beta = 0.1 * jax.random.normal(k2, (c,), jnp.float32)
    mean = 0.1 * jax.random.normal(k3, (c,), jnp.float32)
    var = jax.random.uniform(k4, (c,), jnp.float32, 0.5, 1.5)
    scale = gamma / jnp.sqrt(var + 1e-5)          # eval-mode BN folded
    bias = beta - mean * scale
    return scale.reshape(1, c), bias.reshape(1, c)


def _init_conv_bn(key, cin, cout, k, stride):
    kw_key, bn_key = jax.random.split(key)
    fan_in = k * k * cin
    w = (jax.random.normal(kw_key, (k, k, cin, cout), jnp.float32)
         * jnp.sqrt(2.0 / fan_in))
    scale, bias = _init_bn(bn_key, cout)
    if k == 3 and stride == 1:
        w = w.astype(jnp.bfloat16)                        # tap layout (3,3,cin,cout)
    else:
        kdim = k * k * cin
        kp = _pad_k(kdim)
        w = w.reshape(kdim, cout)
        if kp != kdim:
            w = jnp.pad(w, ((0, kp - kdim), (0, 0)))
        w = w.astype(jnp.bfloat16)                        # GEMM layout (Kp, cout)
    return {"w": w, "scale": scale, "bias": bias}


def make_resnet152_params(key):
    keys = iter(jax.random.split(key, 256))
    params = {"stem": _init_conv_bn(next(keys), 3, 64, 7, 2)}
    expansion = 4
    inplanes = 64
    layers = []
    for planes, nblocks, stride in _CFG:
        blocks = []
        for b in range(nblocks):
            s = stride if b == 0 else 1
            blk = {
                "conv1": _init_conv_bn(next(keys), inplanes, planes, 1, 1),
                "conv2": _init_conv_bn(next(keys), planes, planes, 3, s),
                "conv3": _init_conv_bn(next(keys), planes, planes * expansion, 1, 1),
            }
            if s != 1 or inplanes != planes * expansion:
                blk["downsample"] = _init_conv_bn(next(keys), inplanes,
                                                  planes * expansion, 1, s)
            blocks.append(blk)
            inplanes = planes * expansion
        layers.append(blocks)
    params["layers"] = layers
    return params


# -----------------------------------------------------------------------------
# Forward pass (matches resnet152.forward with get_ha=False)
# -----------------------------------------------------------------------------
@jax.jit
def _stem(p, x_nchw):
    x = jnp.transpose(x_nchw, (0, 2, 3, 1)).astype(jnp.bfloat16)    # NCHW -> NHWC bf16
    x = conv_bn_gemm(x, p, k=7, stride=2, pad=3, relu=True)         # conv1+bn1+relu
    return maxpool_3x3_s2(x)                                        # maxpool


@functools.partial(jax.jit, static_argnames=("stride",))
def _bottleneck(blk, x, *, stride):
    identity = x
    out = conv_bn_gemm(x, blk["conv1"], k=1, stride=1, pad=0, relu=True)
    if stride == 1:
        out = conv3x3_bn(out, blk["conv2"], relu=True)
    else:
        # TODO(synk): the three stride-2 3x3 convs still use the im2col GEMM path.
        out = conv_bn_gemm(out, blk["conv2"], k=3, stride=stride, pad=1, relu=True)
    if "downsample" in blk:
        identity = conv_bn_gemm(x, blk["downsample"], k=1, stride=stride, pad=0,
                                relu=False)
    return conv_bn_gemm(out, blk["conv3"], k=1, stride=1, pad=0, relu=True,
                        residual=identity)


@jax.jit
def _head(x):
    pool = global_avgpool(x)                    # adaptive avgpool -> (N, 2048)
    n = pool.shape[0]
    return pool.reshape(n, 2048, 1, 1).astype(jnp.float32)


def resnet152_forward(params, x_nchw):
    x = _stem(params["stem"], x_nchw)
    for (planes, nblocks, stride), blocks in zip(_CFG, params["layers"]):
        for b, blk in enumerate(blocks):
            x = _bottleneck(blk, x, stride=stride if b == 0 else 1)
    return _head(x)                             # (N, 2048, 1, 1) like PyTorch


if __name__ == "__main__":
    key = jax.random.PRNGKey(0)
    pkey, xkey = jax.random.split(key)
    params = make_resnet152_params(pkey)
    # Small input consistent with the module: 3 input channels, NCHW.
    x = jax.random.normal(xkey, (2, 3, 64, 64), jnp.float32)
    pool = resnet152_forward(params, x)
    pool = jax.block_until_ready(pool)
    assert pool.shape == (2, 2048, 1, 1)
    assert bool(jnp.all(jnp.isfinite(pool)))
    print("KERNEL_OK")
</pallas_src>

<mosaic_0001>
module attributes {stable_mosaic.version = 11 : i64} {
  func.func @_mm_bn_kernel(%arg0: i32, %arg1: i32, %arg2: i32, %arg3: memref<512x256xbf16, #tpu.memory_space<vmem>>, %arg4: memref<256x64xbf16, #tpu.memory_space<vmem>>, %arg5: memref<1x64xf32, #tpu.memory_space<vmem>>, %arg6: memref<1x64xf32, #tpu.memory_space<vmem>>, %arg7: memref<512x64xbf16, #tpu.memory_space<vmem>>, %arg8: memref<512x64xf32, #tpu.memory_space<vmem>>) attributes {dimension_semantics = [#tpu.dimension_semantics<parallel>, #tpu.dimension_semantics<parallel>, #tpu.dimension_semantics<arbitrary>], iteration_bounds = array<i64: 4, 1, 1>, scalar_prefetch = 0 : i64, scratch_operands = 1 : i64, tpu.core_type = #tpu.core_type<tc>, window_params = [{transform_indices = @transform_0, window_bounds = array<i64: 512, 256>}, {transform_indices = @transform_1, window_bounds = array<i64: 256, 64>}, {transform_indices = @transform_2, window_bounds = array<i64: 1, 64>}, {transform_indices = @transform_3, window_bounds = array<i64: 1, 64>}, {transform_indices = @transform_4, window_bounds = array<i64: 512, 64>}]} {
    %c0_i32 = arith.constant 0 : i32
    %0 = arith.cmpi eq, %arg2, %c0_i32 : i32
    %1 = arith.extui %0 : i1 to i32
    %c0_i32_0 = arith.constant 0 : i32
    %2 = arith.cmpi ne, %1, %c0_i32_0 : i32
    scf.if %2 {
      %cst_10 = arith.constant 0.000000e+00 : f32
      %12 = vector.broadcast %cst_10 : f32 to vector<512x64xf32>
      %c0_11 = arith.constant 0 : index
      %c0_12 = arith.constant 0 : index
      %13 = vector.load %arg8[%c0_11, %c0_12] : memref<512x64xf32, #tpu.memory_space<vmem>>, vector<512x64xf32>
      tpu.vector_store %arg8[%c0_11, %c0_12], %12 {strides = array<i32>} : memref<512x64xf32, #tpu.memory_space<vmem>>, vector<512x64xf32>,
    } else {
    }
    %c0 = arith.constant 0 : index
    %c0_1 = arith.constant 0 : index
    %3 = vector.load %arg8[%c0, %c0_1] : memref<512x64xf32, #tpu.memory_space<vmem>>, vector<512x64xf32>
    %c0_2 = arith.constant 0 : index
    %c0_3 = arith.constant 0 : index
    %4 = vector.load %arg3[%c0_2, %c0_3] : memref<512x256xbf16, #tpu.memory_space<vmem>>, vector<512x256xbf16>
    %c0_4 = arith.constant 0 : index
    %c0_5 = arith.constant 0 : index
    %5 = vector.load %arg4[%c0_4, %c0_5] : memref<256x64xbf16, #tpu.memory_space<vmem>>, vector<256x64xbf16>
    %cst = arith.constant dense<0.000000e+00> : vector<512x64xf32>
    %6 = tpu.matmul %4, %5, %cst {dimension_numbers = #tpu.dot_dimension_numbers<[1], [0], [0], [1], [0, 0, 1, 1], [], []>} : vector<512x256xbf16>, vector<256x64xbf16>, vector<512x64xf32> -> vector<512x64xf32>
    %7 = arith.addf %3, %6 : vector<512x64xf32>
    %c0_6 = arith.constant 0 : index
    %c0_7 = arith.constant 0 : index
    %8 = vector.load %arg8[%c0_6, %c0_7] : memref<512x64xf32, #tpu.memory_space<vmem>>, vector<512x64xf32>
    tpu.vector_store %arg8[%c0_6, %c0_7], %7 {strides = array<i32>} : memref<512x64xf32, #tpu.memory_space<vmem>>, vector<512x64xf32>,
    %c0_i32_8 = arith.constant 0 : i32
    %9 = arith.cmpi eq, %arg2, %c0_i32_8 : i32
    %10 = arith.extui %9 : i1 to i32
    %c0_i32_9 = arith.constant 0 : i32
    %11 = arith.cmpi ne, %10, %c0_i32_9 : i32
    scf.if %11 {
      %c0_10 = arith.constant 0 : index
      %c0_11 = arith.constant 0 : index
      %12 = vector.load %arg8[%c0_10, %c0_11] : memref<512x64xf32, #tpu.memory_space<vmem>>, vector<512x64xf32>
      %c0_12 = arith.constant 0 : index
      %c0_13 = arith.constant 0 : index
      %13 = vector.load %arg5[%c0_12, %c0_13] : memref<1x64xf32, #tpu.memory_space<vmem>>, vector<1x64xf32>
      %14 = vector.broadcast %13 : vector<1x64xf32> to vector<512x64xf32>
      %15 = arith.mulf %12, %14 : vector<512x64xf32>
      %c0_14 = arith.constant 0 : index
      %c0_15 = arith.constant 0 : index
      %16 = vector.load %arg6[%c0_14, %c0_15] : memref<1x64xf32, #tpu.memory_space<vmem>>, vector<1x64xf32>
      %17 = vector.broadcast %16 : vector<1x64xf32> to vector<512x64xf32>
      %18 = arith.addf %15, %17 : vector<512x64xf32>
      %cst_16 = arith.constant 0.000000e+00 : f32
      %19 = vector.broadcast %cst_16 : f32 to vector<512x64xf32>
      %20 = arith.maximumf %18, %19 : vector<512x64xf32>
      %21 = arith.truncf %20 : vector<512x64xf32> to vector<512x64xbf16>
      %c0_17 = arith.constant 0 : index
      %c0_18 = arith.constant 0 : index
      %22 = vector.load %arg7[%c0_17, %c0_18] : memref<512x64xbf16, #tpu.memory_space<vmem>>, vector<512x64xbf16>
      tpu.vector_store %arg7[%c0_17, %c0_18], %21 {strides = array<i32>} : memref<512x64xbf16, #tpu.memory_space<vmem>>, vector<512x64xbf16>,
    } else {
    }
    return
  }
  func.func @transform_0(%arg0: i32, %arg1: i32, %arg2: i32) -> (i32, i32) {
    %c0_i32 = arith.constant 0 : i32
    return %arg0, %arg2 : i32, i32
  }
  func.func @transform_1(%arg0: i32, %arg1: i32, %arg2: i32) -> (i32, i32) {
    %c0_i32 = arith.constant 0 : i32
    return %arg2, %arg1 : i32, i32
  }
  func.func @transform_2(%arg0: i32, %arg1: i32, %arg2: i32) -> (i32, i32) {
    %c0_i32 = arith.constant 0 : i32
    %c0_i32_0 = arith.constant 0 : i32
    return %c0_i32, %arg1 : i32, i32
  }
  func.func @transform_3(%arg0: i32, %arg1: i32, %arg2: i32) -> (i32, i32) {
    %c0_i32 = arith.constant 0 : i32
    %c0_i32_0 = arith.constant 0 : i32
    return %c0_i32, %arg1 : i32, i32
  }
  func.func @transform_4(%arg0: i32, %arg1: i32, %arg2: i32) -> (i32, i32) {
    %c0_i32 = arith.constant 0 : i32
    return %arg0, %arg1 : i32, i32
  }
}

module attributes {stable_mosaic.version = 11 : i64} {
  func.func @_max3_kernel(%arg0: i32, %arg1: i32, %arg2: memref<1x1x32x64xbf16, #tpu.memory_space<vmem>>, %arg3: memref<1x1x32x64xbf16, #tpu.memory_space<vmem>>, %arg4: memref<1x1x32x64xbf16, #tpu.memory_space<vmem>>, %arg5: memref<1x1x32x64xbf16, #tpu.memory_space<vmem>>) attributes {dimension_semantics = [#tpu.dimension_semantics<parallel>, #tpu.dimension_semantics<parallel>], iteration_bounds = array<i64: 2, 16>, scalar_prefetch = 0 : i64, scratch_operands = 0 : i64, tpu.core_type = #tpu.core_type<tc>, window_params = [{transform_indices = @transform_0, window_bounds = array<i64: 1, 1, 32, 64>}, {transform_indices = @transform_1, window_bounds = array<i64: 1, 1, 32, 64>}, {transform_indices = @transform_2, window_bounds = array<i64: 1, 1, 32, 64>}, {transform_indices = @transform_3, window_bounds = array<i64: 1, 1, 32, 64>}]} {
    %c0 = arith.constant 0 : index
    %c0_0 = arith.constant 0 : index
    %c0_1 = arith.constant 0 : index
    %c0_2 = arith.constant 0 : index
    %0 = vector.load %arg2[%c0, %c0_0, %c0_1, %c0_2] : memref<1x1x32x64xbf16, #tpu.memory_space<vmem>>, vector<1x1x32x64xbf16>
    %c0_3 = arith.constant 0 : index
    %c0_4 = arith.constant 0 : index
    %c0_5 = arith.constant 0 : index
    %c0_6 = arith.constant 0 : index
    %1 = vector.load %arg3[%c0_3, %c0_4, %c0_5, %c0_6] : memref<1x1x32x64xbf16, #tpu.memory_space<vmem>>, vector<1x1x32x64xbf16>
    %2 = arith.maximumf %0, %1 : vector<1x1x32x64xbf16>
    %c0_7 = arith.constant 0 : index
    %c0_8 = arith.constant 0 : index
    %c0_9 = arith.constant 0 : index
    %c0_10 = arith.constant 0 : index
    %3 = vector.load %arg4[%c0_7, %c0_8, %c0_9, %c0_10] : memref<1x1x32x64xbf16, #tpu.memory_space<vmem>>, vector<1x1x32x64xbf16>
    %4 = arith.maximumf %2, %3 : vector<1x1x32x64xbf16>
    %c0_11 = arith.constant 0 : index
    %c0_12 = arith.constant 0 : index
    %c0_13 = arith.constant 0 : index
    %c0_14 = arith.constant 0 : index
    %5 = vector.load %arg5[%c0_11, %c0_12, %c0_13, %c0_14] : memref<1x1x32x64xbf16, #tpu.memory_space<vmem>>, vector<1x1x32x64xbf16>
    tpu.vector_store %arg5[%c0_11, %c0_12, %c0_13, %c0_14], %4 {strides = array<i32>} : memref<1x1x32x64xbf16, #tpu.memory_space<vmem>>, vector<1x1x32x64xbf16>,
    return
  }
  func.func @transform_0(%arg0: i32, %arg1: i32) -> (i32, i32, i32, i32) {
    %c2_i32 = arith.constant 2 : i32
    %0 = arith.muli %c2_i32, %arg1 : i32
    %c1_i32 = arith.constant 1 : i32
    %1 = arith.subi %0, %c1_i32 : i32
    %c0_i32 = arith.constant 0 : i32
    %2 = arith.addi %1, %c0_i32 : i32
    %c0_i32_0 = arith.constant 0 : i32
    %c31_i32 = arith.constant 31 : i32
    %3 = arith.maxsi %c0_i32_0, %2 : i32
    %4 = arith.minsi %c31_i32, %3 : i32
    %c0_i32_1 = arith.constant 0 : i32
    %c0_i32_2 = arith.constant 0 : i32
    %c0_i32_3 = arith.constant 0 : i32
    return %arg0, %4, %c0_i32_1, %c0_i32_2 : i32, i32, i32, i32
  }
  func.func @transform_1(%arg0: i32, %arg1: i32) -> (i32, i32, i32, i32) {
    %c2_i32 = arith.constant 2 : i32
    %0 = arith.muli %c2_i32, %arg1 : i32
    %c1_i32 = arith.constant 1 : i32
    %1 = arith.subi %0, %c1_i32 : i32
    %c1_i32_0 = arith.constant 1 : i32
    %2 = arith.addi %1, %c1_i32_0 : i32
    %c0_i32 = arith.constant 0 : i32
    %c31_i32 = arith.constant 31 : i32
    %3 = arith.maxsi %c0_i32, %2 : i32
    %4 = arith.minsi %c31_i32, %3 : i32
    %c0_i32_1 = arith.constant 0 : i32
    %c0_i32_2 = arith.constant 0 : i32
    %c0_i32_3 = arith.constant 0 : i32
    return %arg0, %4, %c0_i32_1, %c0_i32_2 : i32, i32, i32, i32
  }
  func.func @transform_2(%arg0: i32, %arg1: i32) -> (i32, i32, i32, i32) {
    %c2_i32 = arith.constant 2 : i32
    %0 = arith.muli %c2_i32, %arg1 : i32
    %c1_i32 = arith.constant 1 : i32
    %1 = arith.subi %0, %c1_i32 : i32
    %c2_i32_0 = arith.constant 2 : i32
    %2 = arith.addi %1, %c2_i32_0 : i32
    %c0_i32 = arith.constant 0 : i32
    %c31_i32 = arith.constant 31 : i32
    %3 = arith.maxsi %c0_i32, %2 : i32
    %4 = arith.minsi %c31_i32, %3 : i32
    %c0_i32_1 = arith.constant 0 : i32
    %c0_i32_2 = arith.constant 0 : i32
    %c0_i32_3 = arith.constant 0 : i32
    return %arg0, %4, %c0_i32_1, %c0_i32_2 : i32, i32, i32, i32
  }
  func.func @transform_3(%arg0: i32, %arg1: i32) -> (i32, i32, i32, i32) {
    %c0_i32 = arith.constant 0 : i32
    %c0_i32_0 = arith.constant 0 : i32
    %c0_i32_1 = arith.constant 0 : i32
    return %arg0, %arg1, %c0_i32, %c0_i32_0 : i32, i32, i32, i32
  }
}

module attributes {stable_mosaic.version = 11 : i64} {
  func.func @_max3_kernel(%arg0: i32, %arg1: memref<16x1024xbf16, #tpu.memory_space<vmem>>, %arg2: memref<16x1024xbf16, #tpu.memory_space<vmem>>, %arg3: memref<16x1024xbf16, #tpu.memory_space<vmem>>, %arg4: memref<16x1024xbf16, #tpu.memory_space<vmem>>) attributes {dimension_semantics = [#tpu.dimension_semantics<parallel>], iteration_bounds = array<i64: 2>, scalar_prefetch = 0 : i64, scratch_operands = 0 : i64, tpu.core_type = #tpu.core_type<tc>, window_params = [{transform_indices = @transform_0, window_bounds = array<i64: 16, 1024>}, {transform_indices = @transform_1, window_bounds = array<i64: 16, 1024>}, {transform_indices = @transform_2, window_bounds = array<i64: 16, 1024>}, {transform_indices = @transform_3, window_bounds = array<i64: 16, 1024>}]} {
    %c0 = arith.constant 0 : index
    %c0_0 = arith.constant 0 : index
    %0 = vector.load %arg1[%c0, %c0_0] : memref<16x1024xbf16, #tpu.memory_space<vmem>>, vector<16x1024xbf16>
    %c0_1 = arith.constant 0 : index
    %c0_2 = arith.constant 0 : index
    %1 = vector.load %arg2[%c0_1, %c0_2] : memref<16x1024xbf16, #tpu.memory_space<vmem>>, vector<16x1024xbf16>
    %2 = arith.maximumf %0, %1 : vector<16x1024xbf16>
    %c0_3 = arith.constant 0 : index
    %c0_4 = arith.constant 0 : index
    %3 = vector.load %arg3[%c0_3, %c0_4] : memref<16x1024xbf16, #tpu.memory_space<vmem>>, vector<16x1024xbf16>
    %4 = arith.maximumf %2, %3 : vector<16x1024xbf16>
    %c0_5 = arith.constant 0 : index
    %c0_6 = arith.constant 0 : index
    %5 = vector.load %arg4[%c0_5, %c0_6] : memref<16x1024xbf16, #tpu.memory_space<vmem>>, vector<16x1024xbf16>
    tpu.vector_store %arg4[%c0_5, %c0_6], %4 {strides = array<i32>} : memref<16x1024xbf16, #tpu.memory_space<vmem>>, vector<16x1024xbf16>,
    return
  }
  func.func @transform_0(%arg0: i32) -> (i32, i32) {
    %c0_i32 = arith.constant 0 : i32
    %c0_i32_0 = arith.constant 0 : i32
    return %arg0, %c0_i32 : i32, i32
  }
  func.func @transform_1(%arg0: i32) -> (i32, i32) {
    %c0_i32 = arith.constant 0 : i32
    %c0_i32_0 = arith.constant 0 : i32
    return %arg0, %c0_i32 : i32, i32
  }
  func.func @transform_2(%arg0: i32) -> (i32, i32) {
    %c0_i32 = arith.constant 0 : i32
    %c0_i32_0 = arith.constant 0 : i32
    return %arg0, %c0_i32 : i32, i32
  }
  func.func @transform_3(%arg0: i32) -> (i32, i32) {
    %c0_i32 = arith.constant 0 : i32
    %c0_i32_0 = arith.constant 0 : i32
    return %arg0, %c0_i32 : i32, i32
  }
}

</mosaic_0001>

<llo_original>
// kernel: _stem.4
$region0: #{_stem.4}
  #allocation0 [shape = 'u32[]', space=smem, size = 0x4, offset = 0x4, fixed_abs, tag = 'smem constant byte address 0x4 - core index']
  #allocation1 [shape = 'u32[144,128]{1,0:T(1,128)}', space=vmem, size = 0x12000, scoped, tag = 'internal scratch']
  %s0 = inlined_call_operand.vmem [shape: bf16[2,32,32,64], index: 0, kind: input, shape index: {}, may-alias: {0,1,2}]
  %s1 = inlined_call_operand.vmem [shape: bf16[2,32,32,64], index: 1, kind: input, shape index: {}, may-alias: {0,1,2}]
  %s2 = inlined_call_operand.vmem [shape: bf16[2,32,32,64], index: 2, kind: input, shape index: {}, may-alias: {0,1,2}]
  %s3 = inlined_call_operand.vmem [shape: bf16[2,16,32,64], index: 3, kind: output, shape index: {}]
  %s4 = sld [smem:[#allocation0]]
  $region45: #{_stem.4} parent=0
    _
  %s6 = ssub.s32 1, %s4
  %s7 = scalar_select 0, %s6, %s4
  loop: start=0, step=1, limit=34
  $region2: #{_stem.4} parent=0 // loop_pre_header
    _
  $region3: #{_stem.4} parent=0 // loop_header
    %s9 = sphi 0, %s13
    %p10 = scmp.ge.s32.totalorder %s9, 34
    %s16 = sphi 0, %s28
    %s17 = sphi 0, %s24
    %s18 = sphi 0, %s16
    %s19 = sphi 0, %s17
    %s20 = sphi 0, %s18
    %s21 = sphi 0, %s19
    %s45 = sphi 0, %s47
    %s48 = sphi 0, %s45
    %s49 = sphi 0, %s48
    %s65 = sphi 0, %s49
    %s83 = sphi 0, %s85
    %s86 = sphi 0, %s83
    %s87 = sphi 0, %s86
    %s103 = sphi 0, %s87
    %s123 = sphi 0, %s125
    %s126 = sphi 0, %s123
    %s127 = sphi 0, %s126
    %s143 = sphi 0, %s127
    %s151 = sphi 0, %s153
    %s154 = sphi 0, %s151
    %s155 = sphi 0, %s154
    %s171 = sphi 0, %s155
  $region4: #{_stem.4} parent=0 // loop_header_branch
    %12 = sbr.rel (%p10) target = $region8
  $region5: #{_stem.4} parent=0 // loop_body
    %s14 = ssub.s32 %s9, 1
    %s15 = ssub.s32 %s9, 2
    %s22 = sadd.s32 1, %s17
    %p23 = scmp.ge.s32.totalorder %s22, 16
    %s24 = scalar_select %p23, 0, %s22
    %s25 = sadd.s32 1, %s16
    %s26 = scalar_select %p23, %s25, %s16
    %p27 = scmp.ge.s32.totalorder %s26, 2
    %s28 = scalar_select %p27, 0, %s26
    %s29 = smul.u32 %s17, 2
    %s30 = ssub.s32 %s29, 1
    %p31 = scmp.gt.s32.totalorder %s30, 0
    %s32 = scalar_select %p31, %s30, 0
    %p33 = scmp.lt.s32.totalorder %s32, 31
    %s34 = scalar_select %p33, %s32, 31
    %s35 = smul.u32 %s24, 2
    %s36 = ssub.s32 %s35, 1
    %p37 = scmp.gt.s32.totalorder %s36, 0
    %s38 = scalar_select %p37, %s36, 0
    %p39 = scmp.lt.s32.totalorder %s38, 31
    %s40 = scalar_select %p39, %s38, 31
    %s41 = ssub.s32 %s16, %s28
    %s42 = ssub.s32 %s34, %s40
    %s43 = sor.u32 %s41, %s42
    %p44 = scmp.eq.s32.totalorder %s43, 0
    %s46 = sadd.s32 %s45, 1
    %s47 = scalar_select %p44, %s45, %s46
    %p50 = pneg %p44
    %p51 = scmp.eq.s32.totalorder %s9, 31
    %p52 = por %p50, %p51
    %p53 = scmp.ne.s32.totalorder %s45, %s48
    %p54 = scmp.eq.s32.totalorder %s9, 0
    %p55 = por %p53, %p54
    %p56 = scmp.ne.s32.totalorder %s45, %s48
    %p57 = scmp.eq.s32.totalorder %s14, 31
    %p58 = por %p56, %p57
    %p59 = scmp.ne.s32.totalorder %s48, %s49
    %p60 = scmp.eq.s32.totalorder %s14, 0
    %p61 = por %p59, %p60
    %p62 = scmp.ne.s32.totalorder %s48, %s49
    %p63 = scmp.eq.s32.totalorder %s15, 31
    %p64 = por %p62, %p63
    %p66 = scmp.ne.s32.totalorder %s49, %s65
    %p67 = scmp.eq.s32.totalorder %s15, 0
    %p68 = por %p66, %p67
    %s69 = smul.u32 %s17, 2
    %p70 = scmp.gt.s32.totalorder %s69, 0
    %s71 = scalar_select %p70, %s69, 0
    %p72 = scmp.lt.s32.totalorder %s71, 31
    %s73 = scalar_select %p72, %s71, 31
    %s74 = smul.u32 %s24, 2
    %p75 = scmp.gt.s32.totalorder %s74, 0
    %s76 = scalar_select %p75, %s74, 0
    %p77 = scmp.lt.s32.totalorder %s76, 31
    %s78 = scalar_select %p77, %s76, 31
    %s79 = ssub.s32 %s16, %s28
    %s80 = ssub.s32 %s73, %s78
    %s81 = sor.u32 %s79, %s80
    %p82 = scmp.eq.s32.totalorder %s81, 0
    %s84 = sadd.s32 %s83, 1
    %s85 = scalar_select %p82, %s83, %s84
    %p88 = pneg %p82
    %p89 = scmp.eq.s32.totalorder %s9, 31
    %p90 = por %p88, %p89
    %p91 = scmp.ne.s32.totalorder %s83, %s86
    %p92 = scmp.eq.s32.totalorder %s9, 0
    %p93 = por %p91, %p92
    %p94 = scmp.ne.s32.totalorder %s83, %s86
    %p95 = scmp.eq.s32.totalorder %s14, 31
    %p96 = por %p94, %p95
    %p97 = scmp.ne.s32.totalorder %s86, %s87
    %p98 = scmp.eq.s32.totalorder %s14, 0
    %p99 = por %p97, %p98
    %p100 = scmp.ne.s32.totalorder %s86, %s87
    %p101 = scmp.eq.s32.totalorder %s15, 31
    %p102 = por %p100, %p101
    %p104 = scmp.ne.s32.totalorder %s87, %s103
    %p105 = scmp.eq.s32.totalorder %s15, 0
    %p106 = por %p104, %p105
    %s107 = smul.u32 %s17, 2
    %s108 = sadd.s32 %s107, 1
    %p109 = scmp.gt.s32.totalorder %s108, 0
    %s110 = scalar_select %p109, %s108, 0
    %p111 = scmp.lt.s32.totalorder %s110, 31
    %s112 = scalar_select %p111, %s110, 31
    %s113 = smul.u32 %s24, 2
    %s114 = sadd.s32 %s113, 1
    %p115 = scmp.gt.s32.totalorder %s114, 0
    %s116 = scalar_select %p115, %s114, 0
    %p117 = scmp.lt.s32.totalorder %s116, 31
    %s118 = scalar_select %p117, %s116, 31
    %s119 = ssub.s32 %s16, %s28
    %s120 = ssub.s32 %s112, %s118
    %s121 = sor.u32 %s119, %s120
    %p122 = scmp.eq.s32.totalorder %s121, 0
    %s124 = sadd.s32 %s123, 1
    %s125 = scalar_select %p122, %s123, %s124
    %p128 = pneg %p122
    %p129 = scmp.eq.s32.totalorder %s9, 31
    %p130 = por %p128, %p129
    %p131 = scmp.ne.s32.totalorder %s123, %s126
    %p132 = scmp.eq.s32.totalorder %s9, 0
    %p133 = por %p131, %p132
    %p134 = scmp.ne.s32.totalorder %s123, %s126
    %p135 = scmp.eq.s32.totalorder %s14, 31
    %p136 = por %p134, %p135
    %p137 = scmp.ne.s32.totalorder %s126, %s127
    %p138 = scmp.eq.s32.totalorder %s14, 0
    %p139 = por %p137, %p138
    %p140 = scmp.ne.s32.totalorder %s126, %s127
    %p141 = scmp.eq.s32.totalorder %s15, 31
    %p142 = por %p140, %p141
    %p144 = scmp.ne.s32.totalorder %s127, %s143
    %p145 = scmp.eq.s32.totalorder %s15, 0
    %p146 = por %p144, %p145
    %s147 = ssub.s32 %s16, %s28
    %s148 = ssub.s32 %s17, %s24
    %s149 = sor.u32 %s147, %s148
    %p150 = scmp.eq.s32.totalorder %s149, 0
    %s152 = sadd.s32 %s151, 1
    %s153 = scalar_select %p150, %s151, %s152
    %p156 = pneg %p150
    %p157 = scmp.eq.s32.totalorder %s9, 31
    %p158 = por %p156, %p157
    %p159 = scmp.ne.s32.totalorder %s151, %s154
    %p160 = scmp.eq.s32.totalorder %s9, 0
    %p161 = por %p159, %p160
    %p162 = scmp.ne.s32.totalorder %s151, %s154
    %p163 = scmp.eq.s32.totalorder %s14, 31
    %p164 = por %p162, %p163
    %p165 = scmp.ne.s32.totalorder %s154, %s155
    %p166 = scmp.eq.s32.totalorder %s14, 0
    %p167 = por %p165, %p166
    %p168 = scmp.ne.s32.totalorder %s154, %s155
    %p169 = scmp.eq.s32.totalorder %s15, 31
    %p170 = por %p168, %p169
    %p172 = scmp.ne.s32.totalorder %s155, %s171
    %p173 = scmp.eq.s32.totalorder %s15, 0
    %p174 = por %p172, %p173
    %p175 = scmp.le.s32.totalorder 1, %s9
    %p176 = scmp.lt.s32.totalorder %s9, 33
    %p177 = pnand %p175, %p176
    %p178 = pneg %p177
    // Predicated region
    $region9: #{_stem.4} parent=5 // pred_check
      _
    $region10: #{_stem.4} parent=5 // pred_check_branch
      %180 = sbr.rel (%p177) target = $region12
    $region11: #{_stem.4} parent=5 // pred_region
      %s181 = ssub.s32 %s9, 1
    $region12: #{_stem.4} parent=5 // pred_fallthru
      _
    %p182 = scmp.lt.s32.totalorder %s9, 32
    // Predicated region
    $region13: #{_stem.4} parent=5 // pred_check
      %p183 = pneg %p182
    $region14: #{_stem.4} parent=5 // pred_check_branch
      %185 = sbr.rel (%p183) target = $region16
    $region15: #{_stem.4} parent=5 // pred_region
      // Predicated region
      $region17: #{_stem.4} parent=15 // pred_check
        %p186 = pneg %p55
      $region18: #{_stem.4} parent=15 // pred_check_branch
        %188 = sbr.rel (%p186) target = $region20
      $region19: #{_stem.4} parent=15 // pred_region
        %s189 = smul.u32 %s17, 2
        %s190 = ssub.s32 %s189, 1
        %p191 = scmp.gt.s32.totalorder %s190, 0
        %s192 = scalar_select %p191, %s190, 0
        %p193 = scmp.lt.s32.totalorder %s192, 31
        %s194 = scalar_select %p193, %s192, 31
        %p195 = scmp.lt.s32.totalorder %s16, 1
        %s196 = scalar_select %p195, %s16, 1
        %p197 = scmp.lt.s32.totalorder %s194, 31
        %s198 = scalar_select %p197, %s194, 31
        %s199 = smul.addr %s198, 4
        %s200 = smul.addr %s196, 128
        %s201 = sadd.s32 %s199, %s200
        %s202 = smul.addr %s201, 4
        %s203 = scalar_lea.vmem %s0, %s202
        %s204 = smul.u32 %s17, 2
        %s205 = ssub.s32 %s204, 1
        %p206 = scmp.gt.s32.totalorder %s205, 0
        %s207 = scalar_select %p206, %s205, 0
        %p208 = scmp.lt.s32.totalorder %s207, 31
        %s209 = scalar_select %p208, %s207, 31
      $region20: #{_stem.4} parent=15 // pred_fallthru
        _
      // Predicated region
      $region21: #{_stem.4} parent=15 // pred_check
        %p210 = pneg %p93
      $region22: #{_stem.4} parent=15 // pred_check_branch
        %212 = sbr.rel (%p210) target = $region24
      $region23: #{_stem.4} parent=15 // pred_region
        %s213 = smul.u32 %s17, 2
        %p214 = scmp.gt.s32.totalorder %s213, 0
        %s215 = scalar_select %p214, %s213, 0
        %p216 = scmp.lt.s32.totalorder %s215, 31
        %s217 = scalar_select %p216, %s215, 31
        %p218 = scmp.lt.s32.totalorder %s16, 1
        %s219 = scalar_select %p218, %s16, 1
        %p220 = scmp.lt.s32.totalorder %s217, 31
        %s221 = scalar_select %p220, %s217, 31
        %s222 = smul.addr %s221, 4
        %s223 = smul.addr %s219, 128
        %s224 = sadd.s32 %s222, %s223
        %s225 = smul.addr %s224, 4
        %s226 = scalar_lea.vmem %s1, %s225
        %s227 = smul.u32 %s17, 2
        %p228 = scmp.gt.s32.totalorder %s227, 0
        %s229 = scalar_select %p228, %s227, 0
        %p230 = scmp.lt.s32.totalorder %s229, 31
        %s231 = scalar_select %p230, %s229, 31
      $region24: #{_stem.4} parent=15 // pred_fallthru
        _
      // Predicated region
      $region25: #{_stem.4} parent=15 // pred_check
        %p232 = pneg %p133
      $region26: #{_stem.4} parent=15 // pred_check_branch
        %234 = sbr.rel (%p232) target = $region28
      $region27: #{_stem.4} parent=15 // pred_region
        %s235 = smul.u32 %s17, 2
        %s236 = sadd.s32 %s235, 1
        %p237 = scmp.gt.s32.totalorder %s236, 0
        %s238 = scalar_select %p237, %s236, 0
        %p239 = scmp.lt.s32.totalorder %s238, 31
        %s240 = scalar_select %p239, %s238, 31
        %p241 = scmp.lt.s32.totalorder %s16, 1
        %s242 = scalar_select %p241, %s16, 1
        %p243 = scmp.lt.s32.totalorder %s240, 31
        %s244 = scalar_select %p243, %s240, 31
        %s245 = smul.addr %s244, 4
        %s246 = smul.addr %s242, 128
        %s247 = sadd.s32 %s245, %s246
        %s248 = smul.addr %s247, 4
        %s249 = scalar_lea.vmem %s2, %s248
        %s250 = smul.u32 %s17, 2
        %s251 = sadd.s32 %s250, 1
        %p252 = scmp.gt.s32.totalorder %s251, 0
        %s253 = scalar_select %p252, %s251, 0
        %p254 = scmp.lt.s32.totalorder %s253, 31
        %s255 = scalar_select %p254, %s253, 31
      $region28: #{_stem.4} parent=15 // pred_fallthru
        _
    $region16: #{_stem.4} parent=5 // pred_fallthru
      _
    %p256 = scmp.le.s32.totalorder 1, %s9
    %p257 = scmp.lt.s32.totalorder %s9, 33
    %p258 = pnand %p256, %p257
    %p259 = pneg %p258
    // Predicated region
    $region29: #{_stem.4} parent=5 // pred_check
      _
    $region30: #{_stem.4} parent=5 // pred_check_branch
      %261 = sbr.rel (%p258) target = $region32
    $region31: #{_stem.4} parent=5 // pred_region
      %s262 = ssub.s32 %s9, 1
      %s263 = smul.u32 %s19, 2
      %s264 = ssub.s32 %s263, 1
      %p265 = scmp.gt.s32.totalorder %s264, 0
      %s266 = scalar_select %p265, %s264, 0
      %p267 = scmp.lt.s32.totalorder %s266, 31
      %s268 = scalar_select %p267, %s266, 31
      %p269 = scmp.lt.s32.totalorder %s18, 1
      %s270 = scalar_select %p269, %s18, 1
      %p271 = scmp.lt.s32.totalorder %s268, 31
      %s272 = scalar_select %p271, %s268, 31
      %s273 = smul.addr %s272, 4
      %s274 = smul.addr %s270, 128
      %s275 = sadd.s32 %s273, %s274
      %s276 = smul.addr %s275, 4
      %s277 = scalar_lea.vmem %s0, %s276
      %p278 = pneg %p61
      %p279 = pneg %p58
      %s280 = smul.u32 %s19, 2
      %p281 = scmp.gt.s32.totalorder %s280, 0
      %s282 = scalar_select %p281, %s280, 0
      %p283 = scmp.lt.s32.totalorder %s282, 31
      %s284 = scalar_select %p283, %s282, 31
      %p285 = scmp.lt.s32.totalorder %s18, 1
      %s286 = scalar_select %p285, %s18, 1
      %p287 = scmp.lt.s32.totalorder %s284, 31
      %s288 = scalar_select %p287, %s284, 31
      %s289 = smul.addr %s288, 4
      %s290 = smul.addr %s286, 128
      %s291 = sadd.s32 %s289, %s290
      %s292 = smul.addr %s291, 4
      %s293 = scalar_lea.vmem %s1, %s292
      %p294 = pneg %p99
      %p295 = pneg %p96
      %s296 = smul.u32 %s19, 2
      %s297 = sadd.s32 %s296, 1
      %p298 = scmp.gt.s32.totalorder %s297, 0
      %s299 = scalar_select %p298, %s297, 0
      %p300 = scmp.lt.s32.totalorder %s299, 31
      %s301 = scalar_select %p300, %s299, 31
      %p302 = scmp.lt.s32.totalorder %s18, 1
      %s303 = scalar_select %p302, %s18, 1
      %p304 = scmp.lt.s32.totalorder %s301, 31
      %s305 = scalar_select %p304, %s301, 31
      %s306 = smul.addr %s305, 4
      %s307 = smul.addr %s303, 128
      %s308 = sadd.s32 %s306, %s307
      %s309 = smul.addr %s308, 4
      %s310 = scalar_lea.vmem %s2, %s309
      %p311 = pneg %p139
      %p312 = pneg %p136
      %p313 = pneg %p167
      %p314 = pneg %p164
      %p315 = scmp.lt.s32.totalorder %s18, 1
      %s316 = scalar_select %p315, %s18, 1
      %p317 = scmp.lt.s32.totalorder %s19, 15
      %s318 = scalar_select %p317, %s19, 15
      %s319 = smul.addr %s318, 4
      %s320 = smul.addr %s316, 64
      %s321 = sadd.s32 %s319, %s320
      %s322 = smul.addr %s321, 4
      %s323 = scalar_lea.vmem %s3, %s322
      %s324 = smul.u32 %s19, 2
      %s325 = ssub.s32 %s324, 1
      %p326 = scmp.gt.s32.totalorder %s325, 0
      %s327 = scalar_select %p326, %s325, 0
      %p328 = scmp.lt.s32.totalorder %s327, 31
      %s329 = scalar_select %p328, %s327, 31
      %p330 = scmp.lt.s32.totalorder %s18, 1
      %s331 = scalar_select %p330, %s18, 1
      %p332 = scmp.lt.s32.totalorder %s329, 31
      %s333 = scalar_select %p332, %s329, 31
      %s334 = smul.addr %s333, 4
      %s335 = smul.addr %s331, 128
      %s336 = sadd.s32 %s334, %s335
      %s337 = smul.addr %s336, 4
      %s338 = scalar_lea.vmem %s0, %s337
      %s339 = smul.u32 %s19, 2
      %s340 = ssub.s32 %s339, 1
      %p341 = scmp.gt.s32.totalorder %s340, 0
      %s342 = scalar_select %p341, %s340, 0
      %p343 = scmp.lt.s32.totalorder %s342, 31
      %s344 = scalar_select %p343, %s342, 31
      %s345 = smul.u32 %s19, 2
      %p346 = scmp.gt.s32.totalorder %s345, 0
      %s347 = scalar_select %p346, %s345, 0
      %p348 = scmp.lt.s32.totalorder %s347, 31
      %s349 = scalar_select %p348, %s347, 31
      %p350 = scmp.lt.s32.totalorder %s18, 1
      %s351 = scalar_select %p350, %s18, 1
      %p352 = scmp.lt.s32.totalorder %s349, 31
      %s353 = scalar_select %p352, %s349, 31
      %s354 = smul.addr %s353, 4
      %s355 = smul.addr %s351, 128
      %s356 = sadd.s32 %s354, %s355
      %s357 = smul.addr %s356, 4
      %s358 = scalar_lea.vmem %s1, %s357
      %s359 = smul.u32 %s19, 2
      %p360 = scmp.gt.s32.totalorder %s359, 0
      %s361 = scalar_select %p360, %s359, 0
      %p362 = scmp.lt.s32.totalorder %s361, 31
      %s363 = scalar_select %p362, %s361, 31
      %s364 = smul.u32 %s19, 2
      %s365 = sadd.s32 %s364, 1
      %p366 = scmp.gt.s32.totalorder %s365, 0
      %s367 = scalar_select %p366, %s365, 0
      %p368 = scmp.lt.s32.totalorder %s367, 31
      %s369 = scalar_select %p368, %s367, 31
      %p370 = scmp.lt.s32.totalorder %s18, 1
      %s371 = scalar_select %p370, %s18, 1
      %p372 = scmp.lt.s32.totalorder %s369, 31
      %s373 = scalar_select %p372, %s369, 31
      %s374 = smul.addr %s373, 4
      %s375 = smul.addr %s371, 128
      %s376 = sadd.s32 %s374, %s375
      %s377 = smul.addr %s376, 4
      %s378 = scalar_lea.vmem %s2, %s377
      %s379 = smul.u32 %s19, 2
      %s380 = sadd.s32 %s379, 1
      %p381 = scmp.gt.s32.totalorder %s380, 0
      %s382 = scalar_select %p381, %s380, 0
      %p383 = scmp.lt.s32.totalorder %s382, 31
      %s384 = scalar_select %p383, %s382, 31
      %p385 = scmp.lt.s32.totalorder %s18, 1
      %s386 = scalar_select %p385, %s18, 1
      %p387 = scmp.lt.s32.totalorder %s19, 15
      %s388 = scalar_select %p387, %s19, 15
      %s389 = smul.addr %s388, 4
      %s390 = smul.addr %s386, 64
      %s391 = sadd.s32 %s389, %s390
      %s392 = smul.addr %s391, 4
      %s393 = scalar_lea.vmem %s3, %s392
      %v394 = vld [vmem:[%s338] sm:$0xf]
      %v395 = vld [vmem:[%s338 + $0x4] sm:$0xf]
      %v396 = vld [vmem:[%s338 + $0x8] sm:$0xf]
      %v397 = vld [vmem:[%s338 + $0xc] sm:$0xf]
      %v398 = vld [vmem:[%s358] sm:$0xf]
      %v399 = vld [vmem:[%s358 + $0x4] sm:$0xf]
      %v400 = vld [vmem:[%s358 + $0x8] sm:$0xf]
      %v401 = vld [vmem:[%s358 + $0xc] sm:$0xf]
      %v402 = vmax.bf16 %v394, %v398
      %v403 = vmax.bf16 %v395, %v399
      %v404 = vmax.bf16 %v396, %v400
      %v405 = vmax.bf16 %v397, %v401
      %v406 = vld [vmem:[%s378] sm:$0xf]
      %v407 = vld [vmem:[%s378 + $0x4] sm:$0xf]
      %v408 = vld [vmem:[%s378 + $0x8] sm:$0xf]
      %v409 = vld [vmem:[%s378 + $0xc] sm:$0xf]
      %v410 = vmax.bf16 %v402, %v406
      %v411 = vmax.bf16 %v403, %v407
      %v412 = vmax.bf16 %v404, %v408
      %v413 = vmax.bf16 %v405, %v409
      %vm414 = vcmask 519168
      %415 = vst.msk [vmem:[%s393] sm:$0xf] %vm414, %v410
      %416 = vst.msk [vmem:[%s393 + $0x4] sm:$0xf] %vm414, %v411
      %417 = vst.msk [vmem:[%s393 + $0x8] sm:$0xf] %vm414, %v412
      %418 = vst.msk [vmem:[%s393 + $0xc] sm:$0xf] %vm414, %v413
      %p419 = scmp.lt.s32.totalorder %s18, 1
      %s420 = scalar_select %p419, %s18, 1
      %p421 = scmp.lt.s32.totalorder %s19, 15
      %s422 = scalar_select %p421, %s19, 15
      %s423 = smul.addr %s422, 4
      %s424 = smul.addr %s420, 64
      %s425 = sadd.s32 %s423, %s424
      %s426 = smul.addr %s425, 4
      %s427 = scalar_lea.vmem %s3, %s426
      // Predicated region
      $region33: #{_stem.4} parent=31 // pred_check
        %p428 = pneg %p164
      $region34: #{_stem.4} parent=31 // pred_check_branch
        %430 = sbr.rel (%p428) target = $region36
      $region35: #{_stem.4} parent=31 // pred_region
        _
      $region36: #{_stem.4} parent=31 // pred_fallthru
        _
    $region32: #{_stem.4} parent=5 // pred_fallthru
      _
    %p431 = scmp.le.s32.totalorder 2, %s9
    // Predicated region
    $region37: #{_stem.4} parent=5 // pred_check
      %p432 = pneg %p431
    $region38: #{_stem.4} parent=5 // pred_check_branch
      %434 = sbr.rel (%p432) target = $region40
    $region39: #{_stem.4} parent=5 // pred_region
      %s435 = ssub.s32 %s9, 2
      // Predicated region
      $region41: #{_stem.4} parent=39 // pred_check
        %p436 = pneg %p170
      $region42: #{_stem.4} parent=39 // pred_check_branch
        %438 = sbr.rel (%p436) target = $region44
      $region43: #{_stem.4} parent=39 // pred_region
        %p439 = scmp.lt.s32.totalorder %s20, 1
        %s440 = scalar_select %p439, %s20, 1
        %p441 = scmp.lt.s32.totalorder %s21, 15
        %s442 = scalar_select %p441, %s21, 15
        %s443 = smul.addr %s442, 4
        %s444 = smul.addr %s440, 64
        %s445 = sadd.s32 %s443, %s444
        %s446 = smul.addr %s445, 4
        %s447 = scalar_lea.vmem %s3, %s446
      $region44: #{_stem.4} parent=39 // pred_fallthru
        _
    $region40: #{_stem.4} parent=5 // pred_fallthru
      _
  $region6: #{_stem.4} parent=0 // loop_footer
    %s13 = sadd.s32 1, %s9
  $region7: #{_stem.4} parent=0 // loop_footer_branch
    %8 = sbr.rel target = $region3
  $region8: #{_stem.4} parent=0 // loop_exit
    _

// kernel: _stem.3
$region0: #{_stem.3}
  #allocation0 [shape = 'u32[]', space=smem, size = 0x4, offset = 0x4, fixed_abs, tag = 'smem constant byte address 0x4 - core index']
  #allocation1 [shape = 'u32[144,128]{1,0:T(1,128)}', space=vmem, size = 0x12000, scoped, tag = 'internal scratch']
  #allocation2 [shape = 'f32[512,64]{1,0:T(8,128)}', space=vmem, size = 0x40000, scoped, tag = 'scratch operand']
  %s0 = inlined_call_operand.vmem [shape: bf16[2048,256], index: 0, kind: input, shape index: {}]
  %s1 = inlined_call_operand.vmem [shape: bf16[256,64], index: 1, kind: input, shape index: {}]
  %s2 = inlined_call_operand.vmem [shape: f32[1,64], index: 2, kind: input, shape index: {}]
  %s3 = inlined_call_operand.vmem [shape: f32[1,64], index: 3, kind: input, shape index: {}]
  %s4 = inlined_call_operand.vmem [shape: bf16[2048,64], index: 4, kind: output, shape index: {}]
  %s5 = sld [smem:[#allocation0]]
  $region57: #{_stem.3} parent=0
    _
  %s7 = ssub.s32 1, %s5
  %s8 = scalar_select 0, %s7, %s5
  loop: start=0, step=1, limit=6
  $region2: #{_stem.3} parent=0 // loop_pre_header
    _
  $region3: #{_stem.3} parent=0 // loop_header
    %s10 = sphi 0, %s14
    %p11 = scmp.ge.s32.totalorder %s10, 6
    %s17 = sphi 0, %s36
    %s18 = sphi 0, %s32
    %s19 = sphi 0, %s28
    %s20 = sphi 0, %s17
    %s21 = sphi 0, %s18
    %s22 = sphi 0, %s19
    %s23 = sphi 0, %s20
    %s24 = sphi 0, %s21
    %s25 = sphi 0, %s22
    %s41 = sphi 0, %s43
    %s44 = sphi 0, %s41
    %s45 = sphi 0, %s44
    %s61 = sphi 0, %s45
    %s69 = sphi 0, %s71
    %s72 = sphi 0, %s69
    %s73 = sphi 0, %s72
    %s89 = sphi 0, %s73
    %s95 = sphi 0, %s97
    %s98 = sphi 0, %s95
    %s99 = sphi 0, %s98
    %s115 = sphi 0, %s99
    %s121 = sphi 0, %s123
    %s124 = sphi 0, %s121
    %s125 = sphi 0, %s124
    %s141 = sphi 0, %s125
    %s149 = sphi 0, %s151
    %s152 = sphi 0, %s149
    %s153 = sphi 0, %s152
    %s169 = sphi 0, %s153
  $region4: #{_stem.3} parent=0 // loop_header_branch
    %13 = sbr.rel (%p11) target = $region8
  $region5: #{_stem.3} parent=0 // loop_body
    %s15 = ssub.s32 %s10, 1
    %s16 = ssub.s32 %s10, 2
    %s26 = sadd.s32 1, %s19
    %p27 = scmp.ge.s32.totalorder %s26, 1
    %s28 = scalar_select %p27, 0, %s26
    %s29 = sadd.s32 1, %s18
    %s30 = scalar_select %p27, %s29, %s18
    %p31 = scmp.ge.s32.totalorder %s30, 1
    %s32 = scalar_select %p31, 0, %s30
    %s33 = sadd.s32 1, %s17
    %s34 = scalar_select %p31, %s33, %s17
    %p35 = scmp.ge.s32.totalorder %s34, 4
    %s36 = scalar_select %p35, 0, %s34
    %s37 = ssub.s32 %s17, %s36
    %s38 = ssub.s32 %s19, %s28
    %s39 = sor.u32 %s37, %s38
    %p40 = scmp.eq.s32.totalorder %s39, 0
    %s42 = sadd.s32 %s41, 1
    %s43 = scalar_select %p40, %s41, %s42
    %p46 = pneg %p40
    %p47 = scmp.eq.s32.totalorder %s10, 3
    %p48 = por %p46, %p47
    %p49 = scmp.ne.s32.totalorder %s41, %s44
    %p50 = scmp.eq.s32.totalorder %s10, 0
    %p51 = por %p49, %p50
    %p52 = scmp.ne.s32.totalorder %s41, %s44
    %p53 = scmp.eq.s32.totalorder %s15, 3
    %p54 = por %p52, %p53
    %p55 = scmp.ne.s32.totalorder %s44, %s45
    %p56 = scmp.eq.s32.totalorder %s15, 0
    %p57 = por %p55, %p56
    %p58 = scmp.ne.s32.totalorder %s44, %s45
    %p59 = scmp.eq.s32.totalorder %s16, 3
    %p60 = por %p58, %p59
    %p62 = scmp.ne.s32.totalorder %s45, %s61
    %p63 = scmp.eq.s32.totalorder %s16, 0
    %p64 = por %p62, %p63
    %s65 = ssub.s32 %s19, %s28
    %s66 = ssub.s32 %s18, %s32
    %s67 = sor.u32 %s65, %s66
    %p68 = scmp.eq.s32.totalorder %s67, 0
    %s70 = sadd.s32 %s69, 1
    %s71 = scalar_select %p68, %s69, %s70
    %p74 = pneg %p68
    %p75 = scmp.eq.s32.totalorder %s10, 3
    %p76 = por %p74, %p75
    %p77 = scmp.ne.s32.totalorder %s69, %s72
    %p78 = scmp.eq.s32.totalorder %s10, 0
    %p79 = por %p77, %p78
    %p80 = scmp.ne.s32.totalorder %s69, %s72
    %p81 = scmp.eq.s32.totalorder %s15, 3
    %p82 = por %p80, %p81
    %p83 = scmp.ne.s32.totalorder %s72, %s73
    %p84 = scmp.eq.s32.totalorder %s15, 0
    %p85 = por %p83, %p84
    %p86 = scmp.ne.s32.totalorder %s72, %s73
    %p87 = scmp.eq.s32.totalorder %s16, 3
    %p88 = por %p86, %p87
    %p90 = scmp.ne.s32.totalorder %s73, %s89
    %p91 = scmp.eq.s32.totalorder %s16, 0
    %p92 = por %p90, %p91
    %s93 = ssub.s32 %s18, %s32
    %p94 = scmp.eq.s32.totalorder %s93, 0
    %s96 = sadd.s32 %s95, 1
    %s97 = scalar_select %p94, %s95, %s96
    %p100 = pneg %p94
    %p101 = scmp.eq.s32.totalorder %s10, 3
    %p102 = por %p100, %p101
    %p103 = scmp.ne.s32.totalorder %s95, %s98
    %p104 = scmp.eq.s32.totalorder %s10, 0
    %p105 = por %p103, %p104
    %p106 = scmp.ne.s32.totalorder %s95, %s98
    %p107 = scmp.eq.s32.totalorder %s15, 3
    %p108 = por %p106, %p107
    %p109 = scmp.ne.s32.totalorder %s98, %s99
    %p110 = scmp.eq.s32.totalorder %s15, 0
    %p111 = por %p109, %p110
    %p112 = scmp.ne.s32.totalorder %s98, %s99
    %p113 = scmp.eq.s32.totalorder %s16, 3
    %p114 = por %p112, %p113
    %p116 = scmp.ne.s32.totalorder %s99, %s115
    %p117 = scmp.eq.s32.totalorder %s16, 0
    %p118 = por %p116, %p117
    %s119 = ssub.s32 %s18, %s32
    %p120 = scmp.eq.s32.totalorder %s119, 0
    %s122 = sadd.s32 %s121, 1
    %s123 = scalar_select %p120, %s121, %s122
    %p126 = pneg %p120
    %p127 = scmp.eq.s32.totalorder %s10, 3
    %p128 = por %p126, %p127
    %p129 = scmp.ne.s32.totalorder %s121, %s124
    %p130 = scmp.eq.s32.totalorder %s10, 0
    %p131 = por %p129, %p130
    %p132 = scmp.ne.s32.totalorder %s121, %s124
    %p133 = scmp.eq.s32.totalorder %s15, 3
    %p134 = por %p132, %p133
    %p135 = scmp.ne.s32.totalorder %s124, %s125
    %p136 = scmp.eq.s32.totalorder %s15, 0
    %p137 = por %p135, %p136
    %p138 = scmp.ne.s32.totalorder %s124, %s125
    %p139 = scmp.eq.s32.totalorder %s16, 3
    %p140 = por %p138, %p139
    %p142 = scmp.ne.s32.totalorder %s125, %s141
    %p143 = scmp.eq.s32.totalorder %s16, 0
    %p144 = por %p142, %p143
    %s145 = ssub.s32 %s17, %s36
    %s146 = ssub.s32 %s18, %s32
    %s147 = sor.u32 %s145, %s146
    %p148 = scmp.eq.s32.totalorder %s147, 0
    %s150 = sadd.s32 %s149, 1
    %s151 = scalar_select %p148, %s149, %s150
    %p154 = pneg %p148
    %p155 = scmp.eq.s32.totalorder %s10, 3
    %p156 = por %p154, %p155
    %p157 = scmp.ne.s32.totalorder %s149, %s152
    %p158 = scmp.eq.s32.totalorder %s10, 0
    %p159 = por %p157, %p158
    %p160 = scmp.ne.s32.totalorder %s149, %s152
    %p161 = scmp.eq.s32.totalorder %s15, 3
    %p162 = por %p160, %p161
    %p163 = scmp.ne.s32.totalorder %s152, %s153
    %p164 = scmp.eq.s32.totalorder %s15, 0
    %p165 = por %p163, %p164
    %p166 = scmp.ne.s32.totalorder %s152, %s153
    %p167 = scmp.eq.s32.totalorder %s16, 3
    %p168 = por %p166, %p167
    %p170 = scmp.ne.s32.totalorder %s153, %s169
    %p171 = scmp.eq.s32.totalorder %s16, 0
    %p172 = por %p170, %p171
    %p173 = scmp.le.s32.totalorder 1, %s10
    %p174 = scmp.lt.s32.totalorder %s10, 5
    %p175 = pnand %p173, %p174
    %p176 = pneg %p175
    // Predicated region
    $region9: #{_stem.3} parent=5 // pred_check
      _
    $region10: #{_stem.3} parent=5 // pred_check_branch
      %178 = sbr.rel (%p175) target = $region12
    $region11: #{_stem.3} parent=5 // pred_region
      %s179 = ssub.s32 %s10, 1
      // Predicated region
      $region13: #{_stem.3} parent=11 // pred_check
        %p180 = pneg %p85
      $region14: #{_stem.3} parent=11 // pred_check_branch
        %182 = sbr.rel (%p180) target = $region16
      $region15: #{_stem.3} parent=11 // pred_region
        %s183 = smul.u32 32, %s22
        %p184 = scmp.lt.s32.totalorder %s183, 31
        %s185 = scalar_select %p184, %s183, 31
        %p186 = scmp.lt.s32.totalorder %s21, 0
        %s187 = scalar_select %p186, %s21, 0
        %s188 = sadd.s32 %s187, %s185
        %s189 = smul.addr %s188, 4
        %s190 = scalar_lea.vmem %s1, %s189
        %s191 = smul.u32 32, %s22
      $region16: #{_stem.3} parent=11 // pred_fallthru
        _
      // Predicated region
      $region17: #{_stem.3} parent=11 // pred_check
        %p192 = pneg %p111
      $region18: #{_stem.3} parent=11 // pred_check_branch
        %194 = sbr.rel (%p192) target = $region20
      $region19: #{_stem.3} parent=11 // pred_region
        %p195 = scmp.lt.s32.totalorder %s21, 0
        %s196 = scalar_select %p195, %s21, 0
        %s197 = scalar_lea.vmem %s2, %s196
      $region20: #{_stem.3} parent=11 // pred_fallthru
        _
      // Predicated region
      $region21: #{_stem.3} parent=11 // pred_check
        %p198 = pneg %p137
      $region22: #{_stem.3} parent=11 // pred_check_branch
        %200 = sbr.rel (%p198) target = $region24
      $region23: #{_stem.3} parent=11 // pred_region
        %p201 = scmp.lt.s32.totalorder %s21, 0
        %s202 = scalar_select %p201, %s21, 0
        %s203 = scalar_lea.vmem %s3, %s202
      $region24: #{_stem.3} parent=11 // pred_fallthru
        _
    $region12: #{_stem.3} parent=5 // pred_fallthru
      _
    %p204 = scmp.lt.s32.totalorder %s10, 4
    // Predicated region
    $region25: #{_stem.3} parent=5 // pred_check
      %p205 = pneg %p204
    $region26: #{_stem.3} parent=5 // pred_check_branch
      %207 = sbr.rel (%p205) target = $region28
    $region27: #{_stem.3} parent=5 // pred_region
      // Predicated region
      $region29: #{_stem.3} parent=27 // pred_check
        %p208 = pneg %p51
      $region30: #{_stem.3} parent=27 // pred_check_branch
        %210 = sbr.rel (%p208) target = $region32
      $region31: #{_stem.3} parent=27 // pred_region
        %s211 = smul.u32 64, %s17
        %s212 = smul.u32 2, %s19
        %p213 = scmp.lt.s32.totalorder %s211, 255
        %s214 = scalar_select %p213, %s211, 255
        %p215 = scmp.lt.s32.totalorder %s212, 1
        %s216 = scalar_select %p215, %s212, 1
        %s217 = smul.addr %s214, 2
        %s218 = sadd.s32 %s216, %s217
        %s219 = smul.addr %s218, 4
        %s220 = scalar_lea.vmem %s0, %s219
        %s221 = smul.u32 64, %s17
        %s222 = smul.u32 2, %s19
      $region32: #{_stem.3} parent=27 // pred_fallthru
        _
    $region28: #{_stem.3} parent=5 // pred_fallthru
      _
    %p223 = scmp.le.s32.totalorder 1, %s10
    %p224 = scmp.lt.s32.totalorder %s10, 5
    %p225 = pnand %p223, %p224
    %p226 = pneg %p225
    // Predicated region
    $region33: #{_stem.3} parent=5 // pred_check
      _
    $region34: #{_stem.3} parent=5 // pred_check_branch
      %228 = sbr.rel (%p225) target = $region36
    $region35: #{_stem.3} parent=5 // pred_region
      %s229 = ssub.s32 %s10, 1
      %s230 = smul.u32 64, %s20
      %s231 = smul.u32 2, %s22
      %p232 = scmp.lt.s32.totalorder %s230, 255
      %s233 = scalar_select %p232, %s230, 255
      %p234 = scmp.lt.s32.totalorder %s231, 1
      %s235 = scalar_select %p234, %s231, 1
      %s236 = smul.addr %s233, 2
      %s237 = sadd.s32 %s235, %s236
      %s238 = smul.addr %s237, 4
      %s239 = scalar_lea.vmem %s0, %s238
      %p240 = pneg %p57
      %p241 = pneg %p54
      %s242 = smul.u32 32, %s22
      %p243 = scmp.lt.s32.totalorder %s242, 31
      %s244 = scalar_select %p243, %s242, 31
      %p245 = scmp.lt.s32.totalorder %s21, 0
      %s246 = scalar_select %p245, %s21, 0
      %s247 = sadd.s32 %s246, %s244
      %s248 = smul.addr %s247, 4
      %s249 = scalar_lea.vmem %s1, %s248
      %p250 = pneg %p85
      %p251 = pneg %p82
      %p252 = scmp.lt.s32.totalorder %s21, 0
      %s253 = scalar_select %p252, %s21, 0
      %s254 = scalar_lea.vmem %s2, %s253
      %p255 = pneg %p111
      %p256 = pneg %p108
      %p257 = scmp.lt.s32.totalorder %s21, 0
      %s258 = scalar_select %p257, %s21, 0
      %s259 = scalar_lea.vmem %s3, %s258
      %p260 = pneg %p137
      %p261 = pneg %p134
      %p262 = pneg %p165
      %p263 = pneg %p162
      %s264 = smul.u32 64, %s20
      %p265 = scmp.lt.s32.totalorder %s264, 255
      %s266 = scalar_select %p265, %s264, 255
      %p267 = scmp.lt.s32.totalorder %s21, 0
      %s268 = scalar_select %p267, %s21, 0
      %s269 = sadd.s32 %s268, %s266
      %s270 = smul.addr %s269, 4
      %s271 = scalar_lea.vmem %s4, %s270
      %s272 = smul.u32 64, %s20
      %s273 = smul.u32 2, %s22
      %p274 = scmp.lt.s32.totalorder %s272, 255
      %s275 = scalar_select %p274, %s272, 255
      %p276 = scmp.lt.s32.totalorder %s273, 1
      %s277 = scalar_select %p276, %s273, 1
      %s278 = smul.addr %s275, 2
      %s279 = sadd.s32 %s277, %s278
      %s280 = smul.addr %s279, 4
      %s281 = scalar_lea.vmem %s0, %s280
      %s282 = smul.u32 64, %s20
      %s283 = smul.u32 2, %s22
      %s284 = smul.u32 32, %s22
      %p285 = scmp.lt.s32.totalorder %s284, 31
      %s286 = scalar_select %p285, %s284, 31
      %p287 = scmp.lt.s32.totalorder %s21, 0
      %s288 = scalar_select %p287, %s21, 0
      %s289 = sadd.s32 %s288, %s286
      %s290 = smul.addr %s289, 4
      %s291 = scalar_lea.vmem %s1, %s290
      %s292 = smul.u32 32, %s22
      %p293 = scmp.lt.s32.totalorder %s21, 0
      %s294 = scalar_select %p293, %s21, 0
      %s295 = scalar_lea.vmem %s2, %s294
      %p296 = scmp.lt.s32.totalorder %s21, 0
      %s297 = scalar_select %p296, %s21, 0
      %s298 = scalar_lea.vmem %s3, %s297
      %s299 = smul.u32 64, %s20
      %p300 = scmp.lt.s32.totalorder %s299, 255
      %s301 = scalar_select %p300, %s299, 255
      %p302 = scmp.lt.s32.totalorder %s21, 0
      %s303 = scalar_select %p302, %s21, 0
      %s304 = sadd.s32 %s303, %s301
      %s305 = smul.addr %s304, 4
      %s306 = scalar_lea.vmem %s4, %s305
      %s307 = smul.u32 64, %s20
      %p309 = scmp.eq.s32.totalorder %s22, 0
      // Predicated region
      $region37: #{_stem.3} parent=35 // pred_check
        %p310 = pneg %p309
      $region38: #{_stem.3} parent=35 // pred_check_branch
        %312 = sbr.rel (%p310) target = $region40
      $region39: #{_stem.3} parent=35 // pred_region
        %vm313 = vcmask 523264
        %314 = vst.msk [vmem:[#allocation2] sm:$0xff] %vm313, 0.0
        %315 = vst.msk [vmem:[#allocation2 + $0x8] sm:$0xff] %vm313, 0.0
        %316 = vst.msk [vmem:[#allocation2 + $0x10] sm:$0xff] %vm313, 0.0
        %317 = vst.msk [vmem:[#allocation2 + $0x18] sm:$0xff] %vm313, 0.0
        %318 = vst.msk [vmem:[#allocation2 + $0x20] sm:$0xff] %vm313, 0.0
        %319 = vst.msk [vmem:[#allocation2 + $0x28] sm:$0xff] %vm313, 0.0
        %320 = vst.msk [vmem:[#allocation2 + $0x30] sm:$0xff] %vm313, 0.0
        %321 = vst.msk [vmem:[#allocation2 + $0x38] sm:$0xff] %vm313, 0.0
        %322 = vst.msk [vmem:[#allocation2 + $0x40] sm:$0xff] %vm313, 0.0
        %323 = vst.msk [vmem:[#allocation2 + $0x48] sm:$0xff] %vm313, 0.0
        %324 = vst.msk [vmem:[#allocation2 + $0x50] sm:$0xff] %vm313, 0.0
        %325 = vst.msk [vmem:[#allocation2 + $0x58] sm:$0xff] %vm313, 0.0
        %326 = vst.msk [vmem:[#allocation2 + $0x60] sm:$0xff] %vm313, 0.0
        %327 = vst.msk [vmem:[#allocation2 + $0x68] sm:$0xff] %vm313, 0.0
        %328 = vst.msk [vmem:[#allocation2 + $0x70] sm:$0xff] %vm313, 0.0
        %329 = vst.msk [vmem:[#allocation2 + $0x78] sm:$0xff] %vm313, 0.0
        %330 = vst.msk [vmem:[#allocation2 + $0x80] sm:$0xff] %vm313, 0.0
        %331 = vst.msk [vmem:[#allocation2 + $0x88] sm:$0xff] %vm313, 0.0
        %332 = vst.msk [vmem:[#allocation2 + $0x90] sm:$0xff] %vm313, 0.0
        %333 = vst.msk [vmem:[#allocation2 + $0x98] sm:$0xff] %vm313, 0.0
        %334 = vst.msk [vmem:[#allocation2 + $0xa0] sm:$0xff] %vm313, 0.0
        %335 = vst.msk [vmem:[#allocation2 + $0xa8] sm:$0xff] %vm313, 0.0
        %336 = vst.msk [vmem:[#allocation2 + $0xb0] sm:$0xff] %vm313, 0.0
        %337 = vst.msk [vmem:[#allocation2 + $0xb8] sm:$0xff] %vm313, 0.0
        %338 = vst.msk [vmem:[#allocation2 + $0xc0] sm:$0xff] %vm313, 0.0
        %339 = vst.msk [vmem:[#allocation2 + $0xc8] sm:$0xff] %vm313, 0.0
        %340 = vst.msk [vmem:[#allocation2 + $0xd0] sm:$0xff] %vm313, 0.0
        %341 = vst.msk [vmem:[#allocation2 + $0xd8] sm:$0xff] %vm313, 0.0
        %342 = vst.msk [vmem:[#allocation2 + $0xe0] sm:$0xff] %vm313, 0.0
        %343 = vst.msk [vmem:[#allocation2 + $0xe8] sm:$0xff] %vm313, 0.0
        %344 = vst.msk [vmem:[#allocation2 + $0xf0] sm:$0xff] %vm313, 0.0
        %345 = vst.msk [vmem:[#allocation2 + $0xf8] sm:$0xff] %vm313, 0.0
        %346 = vst.msk [vmem:[#allocation2 + $0x100] sm:$0xff] %vm313, 0.0
        %347 = vst.msk [vmem:[#allocation2 + $0x108] sm:$0xff] %vm313, 0.0
        %348 = vst.msk [vmem:[#allocation2 + $0x110] sm:$0xff] %vm313, 0.0
        %349 = vst.msk [vmem:[#allocation2 + $0x118] sm:$0xff] %vm313, 0.0
        %350 = vst.msk [vmem:[#allocation2 + $0x120] sm:$0xff] %vm313, 0.0
        %351 = vst.msk [vmem:[#allocation2 + $0x128] sm:$0xff] %vm313, 0.0
        %352 = vst.msk [vmem:[#allocation2 + $0x130] sm:$0xff] %vm313, 0.0
        %353 = vst.msk [vmem:[#allocation2 + $0x138] sm:$0xff] %vm313, 0.0
        %354 = vst.msk [vmem:[#allocation2 + $0x140] sm:$0xff] %vm313, 0.0
        %355 = vst.msk [vmem:[#allocation2 + $0x148] sm:$0xff] %vm313, 0.0
        %356 = vst.msk [vmem:[#allocation2 + $0x150] sm:$0xff] %vm313, 0.0
        %357 = vst.msk [vmem:[#allocation2 + $0x158] sm:$0xff] %vm313, 0.0
        %358 = vst.msk [vmem:[#allocation2 + $0x160] sm:$0xff] %vm313, 0.0
        %359 = vst.msk [vmem:[#allocation2 + $0x168] sm:$0xff] %vm313, 0.0
        %360 = vst.msk [vmem:[#allocation2 + $0x170] sm:$0xff] %vm313, 0.0
        %361 = vst.msk [vmem:[#allocation2 + $0x178] sm:$0xff] %vm313, 0.0
        %362 = vst.msk [vmem:[#allocation2 + $0x180] sm:$0xff] %vm313, 0.0
        %363 = vst.msk [vmem:[#allocation2 + $0x188] sm:$0xff] %vm313, 0.0
        %364 = vst.msk [vmem:[#allocation2 + $0x190] sm:$0xff] %vm313, 0.0
        %365 = vst.msk [vmem:[#allocation2 + $0x198] sm:$0xff] %vm313, 0.0
        %366 = vst.msk [vmem:[#allocation2 + $0x1a0] sm:$0xff] %vm313, 0.0
        %367 = vst.msk [vmem:[#allocation2 + $0x1a8] sm:$0xff] %vm313, 0.0
        %368 = vst.msk [vmem:[#allocation2 + $0x1b0] sm:$0xff] %vm313, 0.0
        %369 = vst.msk [vmem:[#allocation2 + $0x1b8] sm:$0xff] %vm313, 0.0
        %370 = vst.msk [vmem:[#allocation2 + $0x1c0] sm:$0xff] %vm313, 0.0
        %371 = vst.msk [vmem:[#allocation2 + $0x1c8] sm:$0xff] %vm313, 0.0
        %372 = vst.msk [vmem:[#allocation2 + $0x1d0] sm:$0xff] %vm313, 0.0
        %373 = vst.msk [vmem:[#allocation2 + $0x1d8] sm:$0xff] %vm313, 0.0
        %374 = vst.msk [vmem:[#allocation2 + $0x1e0] sm:$0xff] %vm313, 0.0
        %375 = vst.msk [vmem:[#allocation2 + $0x1e8] sm:$0xff] %vm313, 0.0
        %376 = vst.msk [vmem:[#allocation2 + $0x1f0] sm:$0xff] %vm313, 0.0
        %377 = vst.msk [vmem:[#allocation2 + $0x1f8] sm:$0xff] %vm313, 0.0
      $region40: #{_stem.3} parent=35 // pred_fallthru
        _
      %v378 = vld [vmem:[#allocation2] sm:$0xff]
      %v379 = vld [vmem:[#allocation2 + $0x8] sm:$0xff]
      %v380 = vld [vmem:[#allocation2 + $0x10] sm:$0xff]
      %v381 = vld [vmem:[#allocation2 + $0x18] sm:$0xff]
      %v382 = vld [vmem:[#allocation2 + $0x20] sm:$0xff]
      %v383 = vld [vmem:[#allocation2 + $0x28] sm:$0xff]
      %v384 = vld [vmem:[#allocation2 + $0x30] sm:$0xff]
      %v385 = vld [vmem:[#allocation2 + $0x38] sm:$0xff]
      %v386 = vld [vmem:[#allocation2 + $0x40] sm:$0xff]
      %v387 = vld [vmem:[#allocation2 + $0x48] sm:$0xff]
      %v388 = vld [vmem:[#allocation2 + $0x50] sm:$0xff]
      %v389 = vld [vmem:[#allocation2 + $0x58] sm:$0xff]
      %v390 = vld [vmem:[#allocation2 + $0x60] sm:$0xff]
      %v391 = vld [vmem:[#allocation2 + $0x68] sm:$0xff]
      %v392 = vld [vmem:[#allocation2 + $0x70] sm:$0xff]
      %v393 = vld [vmem:[#allocation2 + $0x78] sm:$0xff]
      %v394 = vld [vmem:[#allocation2 + $0x80] sm:$0xff]
      %v395 = vld [vmem:[#allocation2 + $0x88] sm:$0xff]
      %v396 = vld [vmem:[#allocation2 + $0x90] sm:$0xff]
      %v397 = vld [vmem:[#allocation2 + $0x98] sm:$0xff]
      %v398 = vld [vmem:[#allocation2 + $0xa0] sm:$0xff]
      %v399 = vld [vmem:[#allocation2 + $0xa8] sm:$0xff]
      %v400 = vld [vmem:[#allocation2 + $0xb0] sm:$0xff]
      %v401 = vld [vmem:[#allocation2 + $0xb8] sm:$0xff]
      %v402 = vld [vmem:[#allocation2 + $0xc0] sm:$0xff]
      %v403 = vld [vmem:[#allocation2 + $0xc8] sm:$0xff]
      %v404 = vld [vmem:[#allocation2 + $0xd0] sm:$0xff]
      %v405 = vld [vmem:[#allocation2 + $0xd8] sm:$0xff]
      %v406 = vld [vmem:[#allocation2 + $0xe0] sm:$0xff]
      %v407 = vld [vmem:[#allocation2 + $0xe8] sm:$0xff]
      %v408 = vld [vmem:[#allocation2 + $0xf0] sm:$0xff]
      %v409 = vld [vmem:[#allocation2 + $0xf8] sm:$0xff]
      %v410 = vld [vmem:[#allocation2 + $0x100] sm:$0xff]
      %v411 = vld [vmem:[#allocation2 + $0x108] sm:$0xff]
      %v412 = vld [vmem:[#allocation2 + $0x110] sm:$0xff]
      %v413 = vld [vmem:[#allocation2 + $0x118] sm:$0xff]
      %v414 = vld [vmem:[#allocation2 + $0x120] sm:$0xff]
      %v415 = vld [vmem:[#allocation2 + $0x128] sm:$0xff]
      %v416 = vld [vmem:[#allocation2 + $0x130] sm:$0xff]
      %v417 = vld [vmem:[#allocation2 + $0x138] sm:$0xff]
      %v418 = vld [vmem:[#allocation2 + $0x140] sm:$0xff]
      %v419 = vld [vmem:[#allocation2 + $0x148] sm:$0xff]
      %v420 = vld [vmem:[#allocation2 + $0x150] sm:$0xff]
      %v421 = vld [vmem:[#allocation2 + $0x158] sm:$0xff]
      %v422 = vld [vmem:[#allocation2 + $0x160] sm:$0xff]
      %v423 = vld [vmem:[#allocation2 + $0x168] sm:$0xff]
      %v424 = vld [vmem:[#allocation2 + $0x170] sm:$0xff]
      %v425 = vld [vmem:[#allocation2 + $0x178] sm:$0xff]
      %v426 = vld [vmem:[#allocation2 + $0x180] sm:$0xff]
      %v427 = vld [vmem:[#allocation2 + $0x188] sm:$0xff]
      %v428 = vld [vmem:[#allocation2 + $0x190] sm:$0xff]
      %v429 = vld [vmem:[#allocation2 + $0x198] sm:$0xff]
      %v430 = vld [vmem:[#allocation2 + $0x1a0] sm:$0xff]
      %v431 = vld [vmem:[#allocation2 + $0x1a8] sm:$0xff]
      %v432 = vld [vmem:[#allocation2 + $0x1b0] sm:$0xff]
      %v433 = vld [vmem:[#allocation2 + $0x1b8] sm:$0xff]
      %v434 = vld [vmem:[#allocation2 + $0x1c0] sm:$0xff]
      %v435 = vld [vmem:[#allocation2 + $0x1c8] sm:$0xff]
      %v436 = vld [vmem:[#allocation2 + $0x1d0] sm:$0xff]
      %v437 = vld [vmem:[#allocation2 + $0x1d8] sm:$0xff]
      %v438 = vld [vmem:[#allocation2 + $0x1e0] sm:$0xff]
      %v439 = vld [vmem:[#allocation2 + $0x1e8] sm:$0xff]
      %v440 = vld [vmem:[#allocation2 + $0x1f0] sm:$0xff]
      %v441 = vld [vmem:[#allocation2 + $0x1f8] sm:$0xff]
      %v442 = vld [vmem:[%s281] sm:$0xff]
      %v443 = vld [vmem:[%s281 + $0x8] sm:$0xff]
      %v444 = vld [vmem:[%s281 + $0x10] sm:$0xff]
      %v445 = vld [vmem:[%s281 + $0x18] sm:$0xff]
      %v446 = vld [vmem:[%s281 + $0x20] sm:$0xff]
      %v447 = vld [vmem:[%s281 + $0x28] sm:$0xff]
      %v448 = vld [vmem:[%s281 + $0x30] sm:$0xff]
      %v449 = vld [vmem:[%s281 + $0x38] sm:$0xff]
      %v450 = vld [vmem:[%s281 + $0x40] sm:$0xff]
      %v451 = vld [vmem:[%s281 + $0x48] sm:$0xff]
      %v452 = vld [vmem:[%s281 + $0x50] sm:$0xff]
      %v453 = vld [vmem:[%s281 + $0x58] sm:$0xff]
      %v454 = vld [vmem:[%s281 + $0x60] sm:$0xff]
      %v455 = vld [vmem:[%s281 + $0x68] sm:$0xff]
      %v456 = vld [vmem:[%s281 + $0x70] sm:$0xff]
      %v457 = vld [vmem:[%s281 + $0x78] sm:$0xff]
      %v458 = vld [vmem:[%s281 + $0x80] sm:$0xff]
      %v459 = vld [vmem:[%s281 + $0x88] sm:$0xff]
      %v460 = vld [vmem:[%s281 + $0x90] sm:$0xff]
      %v461 = vld [vmem:[%s281 + $0x98] sm:$0xff]
      %v462 = vld [vmem:[%s281 + $0xa0] sm:$0xff]
      %v463 = vld [vmem:[%s281 + $0xa8] sm:$0xff]
      %v464 = vld [vmem:[%s281 + $0xb0] sm:$0xff]
      %v465 = vld [vmem:[%s281 + $0xb8] sm:$0xff]
      %v466 = vld [vmem:[%s281 + $0xc0] sm:$0xff]
      %v467 = vld [vmem:[%s281 + $0xc8] sm:$0xff]
      %v468 = vld [vmem:[%s281 + $0xd0] sm:$0xff]
      %v469 = vld [vmem:[%s281 + $0xd8] sm:$0xff]
      %v470 = vld [vmem:[%s281 + $0xe0] sm:$0xff]
      %v471 = vld [vmem:[%s281 + $0xe8] sm:$0xff]
      %v472 = vld [vmem:[%s281 + $0xf0] sm:$0xff]
      %v473 = vld [vmem:[%s281 + $0xf8] sm:$0xff]
      %v474 = vld [vmem:[%s281 + $0x100] sm:$0xff]
      %v475 = vld [vmem:[%s281 + $0x108] sm:$0xff]
      %v476 = vld [vmem:[%s281 + $0x110] sm:$0xff]
      %v477 = vld [vmem:[%s281 + $0x118] sm:$0xff]
      %v478 = vld [vmem:[%s281 + $0x120] sm:$0xff]
      %v479 = vld [vmem:[%s281 + $0x128] sm:$0xff]
      %v480 = vld [vmem:[%s281 + $0x130] sm:$0xff]
      %v481 = vld [vmem:[%s281 + $0x138] sm:$0xff]
      %v482 = vld [vmem:[%s281 + $0x140] sm:$0xff]
      %v483 = vld [vmem:[%s281 + $0x148] sm:$0xff]
      %v484 = vld [vmem:[%s281 + $0x150] sm:$0xff]
      %v485 = vld [vmem:[%s281 + $0x158] sm:$0xff]
      %v486 = vld [vmem:[%s281 + $0x160] sm:$0xff]
      %v487 = vld [vmem:[%s281 + $0x168] sm:$0xff]
      %v488 = vld [vmem:[%s281 + $0x170] sm:$0xff]
      %v489 = vld [vmem:[%s281 + $0x178] sm:$0xff]
      %v490 = vld [vmem:[%s281 + $0x180] sm:$0xff]
      %v491 = vld [vmem:[%s281 + $0x188] sm:$0xff]
      %v492 = vld [vmem:[%s281 + $0x190] sm:$0xff]
      %v493 = vld [vmem:[%s281 + $0x198] sm:$0xff]
      %v494 = vld [vmem:[%s281 + $0x1a0] sm:$0xff]
      %v495 = vld [vmem:[%s281 + $0x1a8] sm:$0xff]
      %v496 = vld [vmem:[%s281 + $0x1b0] sm:$0xff]
      %v497 = vld [vmem:[%s281 + $0x1b8] sm:$0xff]
      %v498 = vld [vmem:[%s281 + $0x1c0] sm:$0xff]
      %v499 = vld [vmem:[%s281 + $0x1c8] sm:$0xff]
      %v500 = vld [vmem:[%s281 + $0x1d0] sm:$0xff]
      %v501 = vld [vmem:[%s281 + $0x1d8] sm:$0xff]
      %v502 = vld [vmem:[%s281 + $0x1e0] sm:$0xff]
      %v503 = vld [vmem:[%s281 + $0x1e8] sm:$0xff]
      %v504 = vld [vmem:[%s281 + $0x1f0] sm:$0xff]
      %v505 = vld [vmem:[%s281 + $0x1f8] sm:$0xff]
      %v506 = vld [vmem:[%s291] sm:$0xf]
      %v507 = vld [vmem:[%s291 + $0x4] sm:$0xf]
      %v508 = vld [vmem:[%s291 + $0x8] sm:$0xf]
      %v509 = vld [vmem:[%s291 + $0xc] sm:$0xf]
      %v510 = vld [vmem:[%s291 + $0x10] sm:$0xf]
      %v511 = vld [vmem:[%s291 + $0x14] sm:$0xf]
      %v512 = vld [vmem:[%s291 + $0x18] sm:$0xf]
      %v513 = vld [vmem:[%s291 + $0x1c] sm:$0xf]
      %v514 = vld [vmem:[%s291 + $0x20] sm:$0xf]
      %v515 = vld [vmem:[%s291 + $0x24] sm:$0xf]
      %v516 = vld [vmem:[%s291 + $0x28] sm:$0xf]
      %v517 = vld [vmem:[%s291 + $0x2c] sm:$0xf]
      %v518 = vld [vmem:[%s291 + $0x30] sm:$0xf]
      %v519 = vld [vmem:[%s291 + $0x34] sm:$0xf]
      %v520 = vld [vmem:[%s291 + $0x38] sm:$0xf]
      %v521 = vld [vmem:[%s291 + $0x3c] sm:$0xf]
      %v522 = vld [vmem:[%s291 + $0x40] sm:$0xf]
      %v523 = vld [vmem:[%s291 + $0x44] sm:$0xf]
      %v524 = vld [vmem:[%s291 + $0x48] sm:$0xf]
      %v525 = vld [vmem:[%s291 + $0x4c] sm:$0xf]
      %v526 = vld [vmem:[%s291 + $0x50] sm:$0xf]
      %v527 = vld [vmem:[%s291 + $0x54] sm:$0xf]
      %v528 = vld [vmem:[%s291 + $0x58] sm:$0xf]
      %v529 = vld [vmem:[%s291 + $0x5c] sm:$0xf]
      %v530 = vld [vmem:[%s291 + $0x60] sm:$0xf]
      %v531 = vld [vmem:[%s291 + $0x64] sm:$0xf]
      %v532 = vld [vmem:[%s291 + $0x68] sm:$0xf]
      %v533 = vld [vmem:[%s291 + $0x6c] sm:$0xf]
      %v534 = vld [vmem:[%s291 + $0x70] sm:$0xf]
      %v535 = vld [vmem:[%s291 + $0x74] sm:$0xf]
      %v536 = vld [vmem:[%s291 + $0x78] sm:$0xf]
      %v537 = vld [vmem:[%s291 + $0x7c] sm:$0xf]
      %v602 = vunpack.c.l.b16 %v442
      %v603 = vunpack.c.h.b16 %v442
      %v604 = vunpack.c.l.b16 %v443
      %v605 = vunpack.c.h.b16 %v443
      %v606 = vunpack.c.l.b16 %v444
      %v607 = vunpack.c.h.b16 %v444
      %v608 = vunpack.c.l.b16 %v445
      %v609 = vunpack.c.h.b16 %v445
      %v610 = vunpack.c.l.b16 %v446
      %v611 = vunpack.c.h.b16 %v446
      %v612 = vunpack.c.l.b16 %v447
      %v613 = vunpack.c.h.b16 %v447
      %v614 = vunpack.c.l.b16 %v448
      %v615 = vunpack.c.h.b16 %v448
      %v616 = vunpack.c.l.b16 %v449
      %v617 = vunpack.c.h.b16 %v449
      %v618 = vunpack.c.l.b16 %v450
      %v619 = vunpack.c.h.b16 %v450
      %v620 = vunpack.c.l.b16 %v451
      %v621 = vunpack.c.h.b16 %v451
      %v622 = vunpack.c.l.b16 %v452
      %v623 = vunpack.c.h.b16 %v452
      %v624 = vunpack.c.l.b16 %v453
      %v625 = vunpack.c.h.b16 %v453
      %v626 = vunpack.c.l.b16 %v454
      %v627 = vunpack.c.h.b16 %v454
      %v628 = vunpack.c.l.b16 %v455
      %v629 = vunpack.c.h.b16 %v455
      %v630 = vunpack.c.l.b16 %v456
      %v631 = vunpack.c.h.b16 %v456
      %v632 = vunpack.c.l.b16 %v457
      %v633 = vunpack.c.h.b16 %v457
      %v634 = vunpack.c.l.b16 %v458
      %v635 = vunpack.c.h.b16 %v458
      %v636 = vunpack.c.l.b16 %v459
      %v637 = vunpack.c.h.b16 %v459
      %v638 = vunpack.c.l.b16 %v460
      %v639 = vunpack.c.h.b16 %v460
      %v640 = vunpack.c.l.b16 %v461
      %v641 = vunpack.c.h.b16 %v461
      %v642 = vunpack.c.l.b16 %v462
      %v643 = vunpack.c.h.b16 %v462
      %v644 = vunpack.c.l.b16 %v463
      %v645 = vunpack.c.h.b16 %v463
      %v646 = vunpack.c.l.b16 %v464
      %v647 = vunpack.c.h.b16 %v464
      %v648 = vunpack.c.l.b16 %v465
      %v649 = vunpack.c.h.b16 %v465
      %v650 = vunpack.c.l.b16 %v466
      %v651 = vunpack.c.h.b16 %v466
      %v652 = vunpack.c.l.b16 %v467
      %v653 = vunpack.c.h.b16 %v467
      %v654 = vunpack.c.l.b16 %v468
      %v655 = vunpack.c.h.b16 %v468
      %v656 = vunpack.c.l.b16 %v469
      %v657 = vunpack.c.h.b16 %v469
      %v658 = vunpack.c.l.b16 %v470
      %v659 = vunpack.c.h.b16 %v470
      %v660 = vunpack.c.l.b16 %v471
      %v661 = vunpack.c.h.b16 %v471
      %v662 = vunpack.c.l.b16 %v472
      %v663 = vunpack.c.h.b16 %v472
      %v664 = vunpack.c.l.b16 %v473
      %v665 = vunpack.c.h.b16 %v473
      %v666 = vunpack.c.l.b16 %v474
      %v667 = vunpack.c.h.b16 %v474
      %v668 = vunpack.c.l.b16 %v475
      %v669 = vunpack.c.h.b16 %v475
      %v670 = vunpack.c.l.b16 %v476
      %v671 = vunpack.c.h.b16 %v476
      %v672 = vunpack.c.l.b16 %v477
      %v673 = vunpack.c.h.b16 %v477
      %v674 = vunpack.c.l.b16 %v478
      %v675 = vunpack.c.h.b16 %v478
      %v676 = vunpack.c.l.b16 %v479
      %v677 = vunpack.c.h.b16 %v479
      %v678 = vunpack.c.l.b16 %v480
      %v679 = vunpack.c.h.b16 %v480
      %v680 = vunpack.c.l.b16 %v481
      %v681 = vunpack.c.h.b16 %v481
      %v682 = vunpack.c.l.b16 %v482
      %v683 = vunpack.c.h.b16 %v482
      %v684 = vunpack.c.l.b16 %v483
      %v685 = vunpack.c.h.b16 %v483
      %v686 = vunpack.c.l.b16 %v484
      %v687 = vunpack.c.h.b16 %v484
      %v688 = vunpack.c.l.b16 %v485
      %v689 = vunpack.c.h.b16 %v485
      %v690 = vunpack.c.l.b16 %v486
      %v691 = vunpack.c.h.b16 %v486
      %v692 = vunpack.c.l.b16 %v487
      %v693 = vunpack.c.h.b16 %v487
      %v694 = vunpack.c.l.b16 %v488
      %v695 = vunpack.c.h.b16 %v488
      %v696 = vunpack.c.l.b16 %v489
      %v697 = vunpack.c.h.b16 %v489
      %v698 = vunpack.c.l.b16 %v490
      %v699 = vunpack.c.h.b16 %v490
      %v700 = vunpack.c.l.b16 %v491
      %v701 = vunpack.c.h.b16 %v491
      %v702 = vunpack.c.l.b16 %v492
      %v703 = vunpack.c.h.b16 %v492
      %v704 = vunpack.c.l.b16 %v493
      %v705 = vunpack.c.h.b16 %v493
      %v706 = vunpack.c.l.b16 %v494
      %v707 = vunpack.c.h.b16 %v494
      %v708 = vunpack.c.l.b16 %v495
      %v709 = vunpack.c.h.b16 %v495
      %v710 = vunpack.c.l.b16 %v496
      %v711 = vunpack.c.h.b16 %v496
      %v712 = vunpack.c.l.b16 %v497
      %v713 = vunpack.c.h.b16 %v497
      %v714 = vunpack.c.l.b16 %v498
      %v715 = vunpack.c.h.b16 %v498
      %v716 = vunpack.c.l.b16 %v499
      %v717 = vunpack.c.h.b16 %v499
      %v718 = vunpack.c.l.b16 %v500
      %v719 = vunpack.c.h.b16 %v500
      %v720 = vunpack.c.l.b16 %v501
      %v721 = vunpack.c.h.b16 %v501
      %v722 = vunpack.c.l.b16 %v502
      %v723 = vunpack.c.h.b16 %v502
      %v724 = vunpack.c.l.b16 %v503
      %v725 = vunpack.c.h.b16 %v503
      %v726 = vunpack.c.l.b16 %v504
      %v727 = vunpack.c.h.b16 %v504
      %v728 = vunpack.c.l.b16 %v505
      %v729 = vunpack.c.h.b16 %v505
      %v730 = vpack.c.b16 %v604, %v602
      %v731 = vpack.c.b16 %v605, %v603
      %v732 = vpack.c.b16 %v608, %v606
      %v733 = vpack.c.b16 %v609, %v607
      %v734 = vpack.c.b16 %v612, %v610
      %v735 = vpack.c.b16 %v613, %v611
      %v736 = vpack.c.b16 %v616, %v614
      %v737 = vpack.c.b16 %v617, %v615
      %v738 = vpack.c.b16 %v620, %v618
      %v739 = vpack.c.b16 %v621, %v619
      %v740 = vpack.c.b16 %v624, %v622
      %v741 = vpack.c.b16 %v625, %v623
      %v742 = vpack.c.b16 %v628, %v626
      %v743 = vpack.c.b16 %v629, %v627
      %v744 = vpack.c.b16 %v632, %v630
      %v745 = vpack.c.b16 %v633, %v631
      %v746 = vpack.c.b16 %v636, %v634
      %v747 = vpack.c.b16 %v637, %v635
      %v748 = vpack.c.b16 %v640, %v638
      %v749 = vpack.c.b16 %v641, %v639
      %v750 = vpack.c.b16 %v644, %v642
      %v751 = vpack.c.b16 %v645, %v643
      %v752 = vpack.c.b16 %v648, %v646
      %v753 = vpack.c.b16 %v649, %v647
      %v754 = vpack.c.b16 %v652, %v650
      %v755 = vpack.c.b16 %v653, %v651
      %v756 = vpack.c.b16 %v656, %v654
      %v757 = vpack.c.b16 %v657, %v655
      %v758 = vpack.c.b16 %v660, %v658
      %v759 = vpack.c.b16 %v661, %v659
      %v760 = vpack.c.b16 %v664, %v662
      %v761 = vpack.c.b16 %v665, %v663
      %v762 = vpack.c.b16 %v668, %v666
      %v763 = vpack.c.b16 %v669, %v667
      %v764 = vpack.c.b16 %v672, %v670
      %v765 = vpack.c.b16 %v673, %v671
      %v766 = vpack.c.b16 %v676, %v674
      %v767 = vpack.c.b16 %v677, %v675
      %v768 = vpack.c.b16 %v680, %v678
      %v769 = vpack.c.b16 %v681, %v679
      %v770 = vpack.c.b16 %v684, %v682
      %v771 = vpack.c.b16 %v685, %v683
      %v772 = vpack.c.b16 %v688, %v686
      %v773 = vpack.c.b16 %v689, %v687
      %v774 = vpack.c.b16 %v692, %v690
      %v775 = vpack.c.b16 %v693, %v691
      %v776 = vpack.c.b16 %v696, %v694
      %v777 = vpack.c.b16 %v697, %v695
      %v778 = vpack.c.b16 %v700, %v698
      %v779 = vpack.c.b16 %v701, %v699
      %v780 = vpack.c.b16 %v704, %v702
      %v781 = vpack.c.b16 %v705, %v703
      %v782 = vpack.c.b16 %v708, %v706
      %v783 = vpack.c.b16 %v709, %v707
      %v784 = vpack.c.b16 %v712, %v710
      %v785 = vpack.c.b16 %v713, %v711
      %v786 = vpack.c.b16 %v716, %v714
      %v787 = vpack.c.b16 %v717, %v715
      %v788 = vpack.c.b16 %v720, %v718
      %v789 = vpack.c.b16 %v721, %v719
      %v790 = vpack.c.b16 %v724, %v722
      %v791 = vpack.c.b16 %v725, %v723
      %v792 = vpack.c.b16 %v728, %v726
      %v793 = vpack.c.b16 %v729, %v727
      %v890 = vunpack.c.l.b16 %v506
      %v891 = vunpack.c.l.b16 %v507
      %v892 = vunpack.c.l.b16 %v508
      %v893 = vunpack.c.l.b16 %v509
      %v894 = vunpack.c.l.b16 %v510
      %v895 = vunpack.c.l.b16 %v511
      %v896 = vunpack.c.l.b16 %v512
      %v897 = vunpack.c.l.b16 %v513
      %v898 = vunpack.c.l.b16 %v514
      %v899 = vunpack.c.l.b16 %v515
      %v900 = vunpack.c.l.b16 %v516
      %v901 = vunpack.c.l.b16 %v517
      %v902 = vunpack.c.l.b16 %v518
      %v903 = vunpack.c.l.b16 %v519
      %v904 = vunpack.c.l.b16 %v520
      %v905 = vunpack.c.l.b16 %v521
      %v906 = vunpack.c.l.b16 %v522
      %v907 = vunpack.c.l.b16 %v523
      %v908 = vunpack.c.l.b16 %v524
      %v909 = vunpack.c.l.b16 %v525
      %v910 = vunpack.c.l.b16 %v526
      %v911 = vunpack.c.l.b16 %v527
      %v912 = vunpack.c.l.b16 %v528
      %v913 = vunpack.c.l.b16 %v529
      %v914 = vunpack.c.l.b16 %v530
      %v915 = vunpack.c.l.b16 %v531
      %v916 = vunpack.c.l.b16 %v532
      %v917 = vunpack.c.l.b16 %v533
      %v918 = vunpack.c.l.b16 %v534
      %v919 = vunpack.c.l.b16 %v535
      %v920 = vunpack.c.l.b16 %v536
      %v921 = vunpack.c.l.b16 %v537
      %v922 = vpack.c.b16 %v891, %v890
      %v923 = vpack.c.b16 %v893, %v892
      %v924 = vpack.c.b16 %v895, %v894
      %v925 = vpack.c.b16 %v897, %v896
      %v926 = vpack.c.b16 %v899, %v898
      %v927 = vpack.c.b16 %v901, %v900
      %v928 = vpack.c.b16 %v903, %v902
      %v929 = vpack.c.b16 %v905, %v904
      %v930 = vpack.c.b16 %v907, %v906
      %v931 = vpack.c.b16 %v909, %v908
      %v932 = vpack.c.b16 %v911, %v910
      %v933 = vpack.c.b16 %v913, %v912
      %v934 = vpack.c.b16 %v915, %v914
      %v935 = vpack.c.b16 %v917, %v916
      %v936 = vpack.c.b16 %v919, %v918
      %v937 = vpack.c.b16 %v921, %v920
      %954 = vmatprep.subr.bf16.mxu0 0
      %955 = vmatpush1.bf16.msra.mxu0 %v922
      %956 = vmatprep.subr.bf16.mxu0 0
      %957 = vmatpush1.bf16.msra.mxu0 %v923
      %958 = vmatprep.subr.bf16.mxu0 0
      %959 = vmatpush1.bf16.msra.mxu0 %v924
      %960 = vmatprep.subr.bf16.mxu0 0
      %961 = vmatpush1.bf16.msra.mxu0 %v925
      %962 = vmatprep.subr.bf16.mxu0 0
      %963 = vmatpush1.bf16.msra.mxu0 %v926
      %964 = vmatprep.subr.bf16.mxu0 0
      %965 = vmatpush1.bf16.msra.mxu0 %v927
      %966 = vmatprep.subr.bf16.mxu0 0
      %967 = vmatpush1.bf16.msra.mxu0 %v928
      %968 = vmatprep.subr.bf16.mxu0 0
      %969 = vmatpush1.bf16.msra.mxu0 %v929
      %970 = vmatprep.subr.bf16.mxu0 0
      %971 = vmatpush1.bf16.msra.mxu0 %v930
      %972 = vmatprep.subr.bf16.mxu0 0
      %973 = vmatpush1.bf16.msra.mxu0 %v931
      %974 = vmatprep.subr.bf16.mxu0 0
      %975 = vmatpush1.bf16.msra.mxu0 %v932
      %976 = vmatprep.subr.bf16.mxu0 0
      %977 = vmatpush1.bf16.msra.mxu0 %v933
      %978 = vmatprep.subr.bf16.mxu0 0
      %979 = vmatpush1.bf16.msra.mxu0 %v934
      %980 = vmatprep.subr.bf16.mxu0 0
      %981 = vmatpush1.bf16.msra.mxu0 %v935
      %982 = vmatprep.subr.bf16.mxu0 0
      %983 = vmatpush1.bf16.msra.mxu0 %v936
      %984 = vmatprep.subr.bf16.mxu0 0
      %985 = vmatpush1.bf16.msra.mxu0 %v937
      %986 = vmatprep.mubr.bf16.mxu0 %v731
      %987 = vmatmul.mubr.bf16.gmra.mrb[0].mxu0 %v730
      %v988 = vpop.f32.mrb[0].mxu0
      %v989 = vadd.f32 0.0, %v988
      %v990 = vpop.f32.mrb[0].mxu0
      %v991 = vpop.f32.mrb[0].mxu0
      %v992 = vadd.f32 0.0, %v991
      %v993 = vpop.f32.mrb[0].mxu0
      %994 = vmatprep.mubr.bf16.mxu0 %v733
      %995 = vmatmul.mubr.bf16.gmra.mrb[0].mxu0 %v732
      %v996 = vpop.f32.mrb[0].mxu0
      %v997 = vadd.f32 0.0, %v996
      %v998 = vpop.f32.mrb[0].mxu0
      %v999 = vpop.f32.mrb[0].mxu0
      %v1000 = vadd.f32 0.0, %v999
      %v1001 = vpop.f32.mrb[0].mxu0
      %1002 = vmatprep.mubr.bf16.mxu0 %v735
      %1003 = vmatmul.mubr.bf16.gmra.mrb[0].mxu0 %v734
      %v1004 = vpop.f32.mrb[0].mxu0
      %v1005 = vadd.f32 0.0, %v1004
      %v1006 = vpop.f32.mrb[0].mxu0
      %v1007 = vpop.f32.mrb[0].mxu0
      %v1008 = vadd.f32 0.0, %v1007
      %v1009 = vpop.f32.mrb[0].mxu0
      %1010 = vmatprep.mubr.bf16.mxu0 %v737
      %1011 = vmatmul.mubr.bf16.gmra.mrb[0].mxu0 %v736
      %v1012 = vpop.f32.mrb[0].mxu0
      %v1013 = vadd.f32 0.0, %v1012
      %v1014 = vpop.f32.mrb[0].mxu0
      %v1015 = vpop.f32.mrb[0].mxu0
      %v1016 = vadd.f32 0.0, %v1015
      %v1017 = vpop.f32.mrb[0].mxu0
      %1018 = vmatprep.mubr.bf16.mxu0 %v739
      %1019 = vmatmul.mubr.bf16.gmra.mrb[0].mxu0 %v738
      %v1020 = vpop.f32.mrb[0].mxu0
      %v1021 = vadd.f32 0.0, %v1020
      %v1022 = vpop.f32.mrb[0].mxu0
      %v1023 = vpop.f32.mrb[0].mxu0
      %v1024 = vadd.f32 0.0, %v1023
      %v1025 = vpop.f32.mrb[0].mxu0
      %1026 = vmatprep.mubr.bf16.mxu0 %v741
      %1027 = vmatmul.mubr.bf16.gmra.mrb[0].mxu0 %v740
      %v1028 = vpop.f32.mrb[0].mxu0
      %v1029 = vadd.f32 0.0, %v1028
      %v1030 = vpop.f32.mrb[0].mxu0
      %v1031 = vpop.f32.mrb[0].mxu0
      %v1032 = vadd.f32 0.0, %v1031
      %v1033 = vpop.f32.mrb[0].mxu0
      %1034 = vmatprep.mubr.bf16.mxu0 %v743
      %1035 = vmatmul.mubr.bf16.gmra.mrb[0].mxu0 %v742
      %v1036 = vpop.f32.mrb[0].mxu0
      %v1037 = vadd.f32 0.0, %v1036
      %v1038 = vpop.f32.mrb[0].mxu0
      %v1039 = vpop.f32.mrb[0].mxu0
      %v1040 = vadd.f32 0.0, %v1039
      %v1041 = vpop.f32.mrb[0].mxu0
      %1042 = vmatprep.mubr.bf16.mxu0 %v745
      %1043 = vmatmul.mubr.bf16.gmra.mrb[0].mxu0 %v744
      %v1044 = vpop.f32.mrb[0].mxu0
      %v1045 = vadd.f32 0.0, %v1044
      %v1046 = vpop.f32.mrb[0].mxu0
      %v1047 = vpop.f32.mrb[0].mxu0
      %v1048 = vadd.f32 0.0, %v1047
      %v1049 = vpop.f32.mrb[0].mxu0
      %1050 = vmatprep.mubr.bf16.mxu0 %v747
      %1051 = vmatmul.mubr.bf16.gmra.mrb[0].mxu0 %v746
      %v1052 = vpop.f32.mrb[0].mxu0
      %v1053 = vadd.f32 0.0, %v1052
      %v1054 = vpop.f32.mrb[0].mxu0
      %v1055 = vpop.f32.mrb[0].mxu0
      %v1056 = vadd.f32 0.0, %v1055
      %v1057 = vpop.f32.mrb[0].mxu0
      %1058 = vmatprep.mubr.bf16.mxu0 %v749
      %1059 = vmatmul.mubr.bf16.gmra.mrb[0].mxu0 %v748
      %v1060 = vpop.f32.mrb[0].mxu0
      %v1061 = vadd.f32 0.0, %v1060
      %v1062 = vpop.f32.mrb[0].mxu0
      %v1063 = vpop.f32.mrb[0].mxu0
      %v1064 = vadd.f32 0.0, %v1063
      %v1065 = vpop.f32.mrb[0].mxu0
      %1066 = vmatprep.mubr.bf16.mxu0 %v751
      %1067 = vmatmul.mubr.bf16.gmra.mrb[0].mxu0 %v750
      %v1068 = vpop.f32.mrb[0].mxu0
      %v1069 = vadd.f32 0.0, %v1068
      %v1070 = vpop.f32.mrb[0].mxu0
      %v1071 = vpop.f32.mrb[0].mxu0
      %v1072 = vadd.f32 0.0, %v1071
      %v1073 = vpop.f32.mrb[0].mxu0
      %1074 = vmatprep.mubr.bf16.mxu0 %v753
      %1075 = vmatmul.mubr.bf16.gmra.mrb[0].mxu0 %v752
      %v1076 = vpop.f32.mrb[0].mxu0
      %v1077 = vadd.f32 0.0, %v1076
      %v1078 = vpop.f32.mrb[0].mxu0
      %v1079 = vpop.f32.mrb[0].mxu0
      %v1080 = vadd.f32 0.0, %v1079
      %v1081 = vpop.f32.mrb[0].mxu0
      %1082 = vmatprep.mubr.bf16.mxu0 %v755
      %1083 = vmatmul.mubr.bf16.gmra.mrb[0].mxu0 %v754
      %v1084 = vpop.f32.mrb[0].mxu0
      %v1085 = vadd.f32 0.0, %v1084
      %v1086 = vpop.f32.mrb[0].mxu0
      %v1087 = vpop.f32.mrb[0].mxu0
      %v1088 = vadd.f32 0.0, %v1087
      %v1089 = vpop.f32.mrb[0].mxu0
      %1090 = vmatprep.mubr.bf16.mxu0 %v757
      %1091 = vmatmul.mubr.bf16.gmra.mrb[0].mxu0 %v756
      %v1092 = vpop.f32.mrb[0].mxu0
      %v1093 = vadd.f32 0.0, %v1092
      %v1094 = vpop.f32.mrb[0].mxu0
      %v1095 = vpop.f32.mrb[0].mxu0
      %v1096 = vadd.f32 0.0, %v1095
      %v1097 = vpop.f32.mrb[0].mxu0
      %1098 = vmatprep.mubr.bf16.mxu0 %v759
      %1099 = vmatmul.mubr.bf16.gmra.mrb[0].mxu0 %v758
      %v1100 = vpop.f32.mrb[0].mxu0
      %v1101 = vadd.f32 0.0, %v1100
      %v1102 = vpop.f32.mrb[0].mxu0
      %v1103 = vpop.f32.mrb[0].mxu0
      %v1104 = vadd.f32 0.0, %v1103
      %v1105 = vpop.f32.mrb[0].mxu0
      %1106 = vmatprep.mubr.bf16.mxu0 %v761
      %1107 = vmatmul.mubr.bf16.gmra.mrb[0].mxu0 %v760
      %v1108 = vpop.f32.mrb[0].mxu0
      %v1109 = vadd.f32 0.0, %v1108
      %v1110 = vpop.f32.mrb[0].mxu0
      %v1111 = vpop.f32.mrb[0].mxu0
      %v1112 = vadd.f32 0.0, %v1111
      %v1113 = vpop.f32.mrb[0].mxu0
      %1114 = vmatprep.mubr.bf16.mxu0 %v763
      %1115 = vmatmul.mubr.bf16.gmra.mrb[0].mxu0 %v762
      %v1116 = vpop.f32.mrb[0].mxu0
      %v1117 = vadd.f32 0.0, %v1116
      %v1118 = vpop.f32.mrb[0].mxu0
      %v1119 = vpop.f32.mrb[0].mxu0
      %v1120 = vadd.f32 0.0, %v1119
      %v1121 = vpop.f32.mrb[0].mxu0
      %1122 = vmatprep.mubr.bf16.mxu0 %v765
      %1123 = vmatmul.mubr.bf16.gmra.mrb[0].mxu0 %v764
      %v1124 = vpop.f32.mrb[0].mxu0
      %v1125 = vadd.f32 0.0, %v1124
      %v1126 = vpop.f32.mrb[0].mxu0
      %v1127 = vpop.f32.mrb[0].mxu0
      %v1128 = vadd.f32 0.0, %v1127
      %v1129 = vpop.f32.mrb[0].mxu0
      %1130 = vmatprep.mubr.bf16.mxu0 %v767
      %1131 = vmatmul.mubr.bf16.gmra.mrb[0].mxu0 %v766
      %v1132 = vpop.f32.mrb[0].mxu0
      %v1133 = vadd.f32 0.0, %v1132
      %v1134 = vpop.f32.mrb[0].mxu0
      %v1135 = vpop.f32.mrb[0].mxu0
      %v1136 = vadd.f32 0.0, %v1135
      %v1137 = vpop.f32.mrb[0].mxu0
      %1138 = vmatprep.mubr.bf16.mxu0 %v769
      %1139 = vmatmul.mubr.bf16.gmra.mrb[0].mxu0 %v768
      %v1140 = vpop.f32.mrb[0].mxu0
      %v1141 = vadd.f32 0.0, %v1140
      %v1142 = vpop.f32.mrb[0].mxu0
      %v1143 = vpop.f32.mrb[0].mxu0
      %v1144 = vadd.f32 0.0, %v1143
      %v1145 = vpop.f32.mrb[0].mxu0
      %1146 = vmatprep.mubr.bf16.mxu0 %v771
      %1147 = vmatmul.mubr.bf16.gmra.mrb[0].mxu0 %v770
      %v1148 = vpop.f32.mrb[0].mxu0
      %v1149 = vadd.f32 0.0, %v1148
      %v1150 = vpop.f32.mrb[0].mxu0
      %v1151 = vpop.f32.mrb[0].mxu0
      %v1152 = vadd.f32 0.0, %v1151
      %v1153 = vpop.f32.mrb[0].mxu0
      %1154 = vmatprep.mubr.bf16.mxu0 %v773
      %1155 = vmatmul.mubr.bf16.gmra.mrb[0].mxu0 %v772
      %v1156 = vpop.f32.mrb[0].mxu0
      %v1157 = vadd.f32 0.0, %v1156
      %v1158 = vpop.f32.mrb[0].mxu0
      %v1159 = vpop.f32.mrb[0].mxu0
      %v1160 = vadd.f32 0.0, %v1159
      %v1161 = vpop.f32.mrb[0].mxu0
      %1162 = vmatprep.mubr.bf16.mxu0 %v775
      %1163 = vmatmul.mubr.bf16.gmra.mrb[0].mxu0 %v774
      %v1164 = vpop.f32.mrb[0].mxu0
      %v1165 = vadd.f32 0.0, %v1164
      %v1166 = vpop.f32.mrb[0].mxu0
      %v1167 = vpop.f32.mrb[0].mxu0
      %v1168 = vadd.f32 0.0, %v1167
      %v1169 = vpop.f32.mrb[0].mxu0
      %1170 = vmatprep.mubr.bf16.mxu0 %v777
      %1171 = vmatmul.mubr.bf16.gmra.mrb[0].mxu0 %v776
      %v1172 = vpop.f32.mrb[0].mxu0
      %v1173 = vadd.f32 0.0, %v1172
      %v1174 = vpop.f32.mrb[0].mxu0
      %v1175 = vpop.f32.mrb[0].mxu0
      %v1176 = vadd.f32 0.0, %v1175
      %v1177 = vpop.f32.mrb[0].mxu0
      %1178 = vmatprep.mubr.bf16.mxu0 %v779
      %1179 = vmatmul.mubr.bf16.gmra.mrb[0].mxu0 %v778
      %v1180 = vpop.f32.mrb[0].mxu0
      %v1181 = vadd.f32 0.0, %v1180
      %v1182 = vpop.f32.mrb[0].mxu0
      %v1183 = vpop.f32.mrb[0].mxu0
      %v1184 = vadd.f32 0.0, %v1183
      %v1185 = vpop.f32.mrb[0].mxu0
      %1186 = vmatprep.mubr.bf16.mxu0 %v781
      %1187 = vmatmul.mubr.bf16.gmra.mrb[0].mxu0 %v780
      %v1188 = vpop.f32.mrb[0].mxu0
      %v1189 = vadd.f32 0.0, %v1188
      %v1190 = vpop.f32.mrb[0].mxu0
      %v1191 = vpop.f32.mrb[0].mxu0
      %v1192 = vadd.f32 0.0, %v1191
      %v1193 = vpop.f32.mrb[0].mxu0
      %1194 = vmatprep.mubr.bf16.mxu0 %v783
      %1195 = vmatmul.mubr.bf16.gmra.mrb[0].mxu0 %v782
      %v1196 = vpop.f32.mrb[0].mxu0
      %v1197 = vadd.f32 0.0, %v1196
      %v1198 = vpop.f32.mrb[0].mxu0
      %v1199 = vpop.f32.mrb[0].mxu0
      %v1200 = vadd.f32 0.0, %v1199
      %v1201 = vpop.f32.mrb[0].mxu0
      %1202 = vmatprep.mubr.bf16.mxu0 %v785
      %1203 = vmatmul.mubr.bf16.gmra.mrb[0].mxu0 %v784
      %v1204 = vpop.f32.mrb[0].mxu0
      %v1205 = vadd.f32 0.0, %v1204
      %v1206 = vpop.f32.mrb[0].mxu0
      %v1207 = vpop.f32.mrb[0].mxu0
      %v1208 = vadd.f32 0.0, %v1207
      %v1209 = vpop.f32.mrb[0].mxu0
      %1210 = vmatprep.mubr.bf16.mxu0 %v787
      %1211 = vmatmul.mubr.bf16.gmra.mrb[0].mxu0 %v786
      %v1212 = vpop.f32.mrb[0].mxu0
      %v1213 = vadd.f32 0.0, %v1212
      %v1214 = vpop.f32.mrb[0].mxu0
      %v1215 = vpop.f32.mrb[0].mxu0
      %v1216 = vadd.f32 0.0, %v1215
      %v1217 = vpop.f32.mrb[0].mxu0
      %1218 = vmatprep.mubr.bf16.mxu0 %v789
      %1219 = vmatmul.mubr.bf16.gmra.mrb[0].mxu0 %v788
      %v1220 = vpop.f32.mrb[0].mxu0
      %v1221 = vadd.f32 0.0, %v1220
      %v1222 = vpop.f32.mrb[0].mxu0
      %v1223 = vpop.f32.mrb[0].mxu0
      %v1224 = vadd.f32 0.0, %v1223
      %v1225 = vpop.f32.mrb[0].mxu0
      %1226 = vmatprep.mubr.bf16.mxu0 %v791
      %1227 = vmatmul.mubr.bf16.gmra.mrb[0].mxu0 %v790
      %v1228 = vpop.f32.mrb[0].mxu0
      %v1229 = vadd.f32 0.0, %v1228
      %v1230 = vpop.f32.mrb[0].mxu0
      %v1231 = vpop.f32.mrb[0].mxu0
      %v1232 = vadd.f32 0.0, %v1231
      %v1233 = vpop.f32.mrb[0].mxu0
      %1234 = vmatprep.mubr.bf16.mxu0 %v793
      %1235 = vmatmul.mubr.bf16.gmra.mrb[0].mxu0 %v792
      %v1236 = vpop.f32.mrb[0].mxu0
      %v1237 = vadd.f32 0.0, %v1236
      %v1238 = vpop.f32.mrb[0].mxu0
      %v1239 = vpop.f32.mrb[0].mxu0
      %v1240 = vadd.f32 0.0, %v1239
      %v1241 = vpop.f32.mrb[0].mxu0
      %1242 = vdwg.mxu0
      %v1243 = vadd.f32 %v378, %v989
      %v1244 = vadd.f32 %v379, %v992
      %v1245 = vadd.f32 %v380, %v997
      %v1246 = vadd.f32 %v381, %v1000
      %v1247 = vadd.f32 %v382, %v1005
      %v1248 = vadd.f32 %v383, %v1008
      %v1249 = vadd.f32 %v384, %v1013
      %v1250 = vadd.f32 %v385, %v1016
      %v1251 = vadd.f32 %v386, %v1021
      %v1252 = vadd.f32 %v387, %v1024
      %v1253 = vadd.f32 %v388, %v1029
      %v1254 = vadd.f32 %v389, %v1032
      %v1255 = vadd.f32 %v390, %v1037
      %v1256 = vadd.f32 %v391, %v1040
      %v1257 = vadd.f32 %v392, %v1045
      %v1258 = vadd.f32 %v393, %v1048
      %v1259 = vadd.f32 %v394, %v1053
      %v1260 = vadd.f32 %v395, %v1056
      %v1261 = vadd.f32 %v396, %v1061
      %v1262 = vadd.f32 %v397, %v1064
      %v1263 = vadd.f32 %v398, %v1069
      %v1264 = vadd.f32 %v399, %v1072
      %v1265 = vadd.f32 %v400, %v1077
      %v1266 = vadd.f32 %v401, %v1080
      %v1267 = vadd.f32 %v402, %v1085
      %v1268 = vadd.f32 %v403, %v1088
      %v1269 = vadd.f32 %v404, %v1093
      %v1270 = vadd.f32 %v405, %v1096
      %v1271 = vadd.f32 %v406, %v1101
      %v1272 = vadd.f32 %v407, %v1104
      %v1273 = vadd.f32 %v408, %v1109
      %v1274 = vadd.f32 %v409, %v1112
      %v1275 = vadd.f32 %v410, %v1117
      %v1276 = vadd.f32 %v411, %v1120
      %v1277 = vadd.f32 %v412, %v1125
      %v1278 = vadd.f32 %v413, %v1128
      %v1279 = vadd.f32 %v414, %v1133
      %v1280 = vadd.f32 %v415, %v1136
      %v1281 = vadd.f32 %v416, %v1141
      %v1282 = vadd.f32 %v417, %v1144
      %v1283 = vadd.f32 %v418, %v1149
      %v1284 = vadd.f32 %v419, %v1152
      %v1285 = vadd.f32 %v420, %v1157
      %v1286 = vadd.f32 %v421, %v1160
      %v1287 = vadd.f32 %v422, %v1165
      %v1288 = vadd.f32 %v423, %v1168
      %v1289 = vadd.f32 %v424, %v1173
      %v1290 = vadd.f32 %v425, %v1176
      %v1291 = vadd.f32 %v426, %v1181
      %v1292 = vadd.f32 %v427, %v1184
      %v1293 = vadd.f32 %v428, %v1189
      %v1294 = vadd.f32 %v429, %v1192
      %v1295 = vadd.f32 %v430, %v1197
      %v1296 = vadd.f32 %v431, %v1200
      %v1297 = vadd.f32 %v432, %v1205
      %v1298 = vadd.f32 %v433, %v1208
      %v1299 = vadd.f32 %v434, %v1213
      %v1300 = vadd.f32 %v435, %v1216
      %v1301 = vadd.f32 %v436, %v1221
      %v1302 = vadd.f32 %v437, %v1224
      %v1303 = vadd.f32 %v438, %v1229
      %v1304 = vadd.f32 %v439, %v1232
      %v1305 = vadd.f32 %v440, %v1237
      %v1306 = vadd.f32 %v441, %v1240
      %vm1307 = vcmask 523264
      %1308 = vst.msk [vmem:[#allocation2] sm:$0xff] %vm1307, %v1243
      %1309 = vst.msk [vmem:[#allocation2 + $0x8] sm:$0xff] %vm1307, %v1244
      %1310 = vst.msk [vmem:[#allocation2 + $0x10] sm:$0xff] %vm1307, %v1245
      %1311 = vst.msk [vmem:[#allocation2 + $0x18] sm:$0xff] %vm1307, %v1246
      %1312 = vst.msk [vmem:[#allocation2 + $0x20] sm:$0xff] %vm1307, %v1247
      %1313 = vst.msk [vmem:[#allocation2 + $0x28] sm:$0xff] %vm1307, %v1248
      %1314 = vst.msk [vmem:[#allocation2 + $0x30] sm:$0xff] %vm1307, %v1249
      %1315 = vst.msk [vmem:[#allocation2 + $0x38] sm:$0xff] %vm1307, %v1250
      %1316 = vst.msk [vmem:[#allocation2 + $0x40] sm:$0xff] %vm1307, %v1251
      %1317 = vst.msk [vmem:[#allocation2 + $0x48] sm:$0xff] %vm1307, %v1252
      %1318 = vst.msk [vmem:[#allocation2 + $0x50] sm:$0xff] %vm1307, %v1253
      %1319 = vst.msk [vmem:[#allocation2 + $0x58] sm:$0xff] %vm1307, %v1254
      %1320 = vst.msk [vmem:[#allocation2 + $0x60] sm:$0xff] %vm1307, %v1255
      %1321 = vst.msk [vmem:[#allocation2 + $0x68] sm:$0xff] %vm1307, %v1256
      %1322 = vst.msk [vmem:[#allocation2 + $0x70] sm:$0xff] %vm1307, %v1257
      %1323 = vst.msk [vmem:[#allocation2 + $0x78] sm:$0xff] %vm1307, %v1258
      %1324 = vst.msk [vmem:[#allocation2 + $0x80] sm:$0xff] %vm1307, %v1259
      %1325 = vst.msk [vmem:[#allocation2 + $0x88] sm:$0xff] %vm1307, %v1260
      %1326 = vst.msk [vmem:[#allocation2 + $0x90] sm:$0xff] %vm1307, %v1261
      %1327 = vst.msk [vmem:[#allocation2 + $0x98] sm:$0xff] %vm1307, %v1262
      %1328 = vst.msk [vmem:[#allocation2 + $0xa0] sm:$0xff] %vm1307, %v1263
      %1329 = vst.msk [vmem:[#allocation2 + $0xa8] sm:$0xff] %vm1307, %v1264
      %1330 = vst.msk [vmem:[#allocation2 + $0xb0] sm:$0xff] %vm1307, %v1265
      %1331 = vst.msk [vmem:[#allocation2 + $0xb8] sm:$0xff] %vm1307, %v1266
      %1332 = vst.msk [vmem:[#allocation2 + $0xc0] sm:$0xff] %vm1307, %v1267
      %1333 = vst.msk [vmem:[#allocation2 + $0xc8] sm:$0xff] %vm1307, %v1268
      %1334 = vst.msk [vmem:[#allocation2 + $0xd0] sm:$0xff] %vm1307, %v1269
      %1335 = vst.msk [vmem:[#allocation2 + $0xd8] sm:$0xff] %vm1307, %v1270
      %1336 = vst.msk [vmem:[#allocation2 + $0xe0] sm:$0xff] %vm1307, %v1271
      %1337 = vst.msk [vmem:[#allocation2 + $0xe8] sm:$0xff] %vm1307, %v1272
      %1338 = vst.msk [vmem:[#allocation2 + $0xf0] sm:$0xff] %vm1307, %v1273
      %1339 = vst.msk [vmem:[#allocation2 + $0xf8] sm:$0xff] %vm1307, %v1274
      %1340 = vst.msk [vmem:[#allocation2 + $0x100] sm:$0xff] %vm1307, %v1275
      %1341 = vst.msk [vmem:[#allocation2 + $0x108] sm:$0xff] %vm1307, %v1276
      %1342 = vst.msk [vmem:[#allocation2 + $0x110] sm:$0xff] %vm1307, %v1277
      %1343 = vst.msk [vmem:[#allocation2 + $0x118] sm:$0xff] %vm1307, %v1278
      %1344 = vst.msk [vmem:[#allocation2 + $0x120] sm:$0xff] %vm1307, %v1279
      %1345 = vst.msk [vmem:[#allocation2 + $0x128] sm:$0xff] %vm1307, %v1280
      %1346 = vst.msk [vmem:[#allocation2 + $0x130] sm:$0xff] %vm1307, %v1281
      %1347 = vst.msk [vmem:[#allocation2 + $0x138] sm:$0xff] %vm1307, %v1282
      %1348 = vst.msk [vmem:[#allocation2 + $0x140] sm:$0xff] %vm1307, %v1283
      %1349 = vst.msk [vmem:[#allocation2 + $0x148] sm:$0xff] %vm1307, %v1284
      %1350 = vst.msk [vmem:[#allocation2 + $0x150] sm:$0xff] %vm1307, %v1285
      %1351 = vst.msk [vmem:[#allocation2 + $0x158] sm:$0xff] %vm1307, %v1286
      %1352 = vst.msk [vmem:[#allocation2 + $0x160] sm:$0xff] %vm1307, %v1287
      %1353 = vst.msk [vmem:[#allocation2 + $0x168] sm:$0xff] %vm1307, %v1288
      %1354 = vst.msk [vmem:[#allocation2 + $0x170] sm:$0xff] %vm1307, %v1289
      %1355 = vst.msk [vmem:[#allocation2 + $0x178] sm:$0xff] %vm1307, %v1290
      %1356 = vst.msk [vmem:[#allocation2 + $0x180] sm:$0xff] %vm1307, %v1291
      %1357 = vst.msk [vmem:[#allocation2 + $0x188] sm:$0xff] %vm1307, %v1292
      %1358 = vst.msk [vmem:[#allocation2 + $0x190] sm:$0xff] %vm1307, %v1293
      %1359 = vst.msk [vmem:[#allocation2 + $0x198] sm:$0xff] %vm1307, %v1294
      %1360 = vst.msk [vmem:[#allocation2 + $0x1a0] sm:$0xff] %vm1307, %v1295
      %1361 = vst.msk [vmem:[#allocation2 + $0x1a8] sm:$0xff] %vm1307, %v1296
      %1362 = vst.msk [vmem:[#allocation2 + $0x1b0] sm:$0xff] %vm1307, %v1297
      %1363 = vst.msk [vmem:[#allocation2 + $0x1b8] sm:$0xff] %vm1307, %v1298
      %1364 = vst.msk [vmem:[#allocation2 + $0x1c0] sm:$0xff] %vm1307, %v1299
      %1365 = vst.msk [vmem:[#allocation2 + $0x1c8] sm:$0xff] %vm1307, %v1300
      %1366 = vst.msk [vmem:[#allocation2 + $0x1d0] sm:$0xff] %vm1307, %v1301
      %1367 = vst.msk [vmem:[#allocation2 + $0x1d8] sm:$0xff] %vm1307, %v1302
      %1368 = vst.msk [vmem:[#allocation2 + $0x1e0] sm:$0xff] %vm1307, %v1303
      %1369 = vst.msk [vmem:[#allocation2 + $0x1e8] sm:$0xff] %vm1307, %v1304
      %1370 = vst.msk [vmem:[#allocation2 + $0x1f0] sm:$0xff] %vm1307, %v1305
      %1371 = vst.msk [vmem:[#allocation2 + $0x1f8] sm:$0xff] %vm1307, %v1306
      // Predicated region
      $region41: #{_stem.3} parent=35 // pred_check
        %p1372 = pneg %p309
      $region42: #{_stem.3} parent=35 // pred_check_branch
        %1374 = sbr.rel (%p1372) target = $region44
      $region43: #{_stem.3} parent=35 // pred_region
        %v1375 = vld [vmem:[#allocation2] sm:$0xff]
        %v1376 = vld [vmem:[#allocation2 + $0x8] sm:$0xff]
        %v1377 = vld [vmem:[#allocation2 + $0x10] sm:$0xff]
        %v1378 = vld [vmem:[#allocation2 + $0x18] sm:$0xff]
        %v1379 = vld [vmem:[#allocation2 + $0x20] sm:$0xff]
        %v1380 = vld [vmem:[#allocation2 + $0x28] sm:$0xff]
        %v1381 = vld [vmem:[#allocation2 + $0x30] sm:$0xff]
        %v1382 = vld [vmem:[#allocation2 + $0x38] sm:$0xff]
        %v1383 = vld [vmem:[#allocation2 + $0x40] sm:$0xff]
        %v1384 = vld [vmem:[#allocation2 + $0x48] sm:$0xff]
        %v1385 = vld [vmem:[#allocation2 + $0x50] sm:$0xff]
        %v1386 = vld [vmem:[#allocation2 + $0x58] sm:$0xff]
        %v1387 = vld [vmem:[#allocation2 + $0x60] sm:$0xff]
        %v1388 = vld [vmem:[#allocation2 + $0x68] sm:$0xff]
        %v1389 = vld [vmem:[#allocation2 + $0x70] sm:$0xff]
        %v1390 = vld [vmem:[#allocation2 + $0x78] sm:$0xff]
        %v1391 = vld [vmem:[#allocation2 + $0x80] sm:$0xff]
        %v1392 = vld [vmem:[#allocation2 + $0x88] sm:$0xff]
        %v1393 = vld [vmem:[#allocation2 + $0x90] sm:$0xff]
        %v1394 = vld [vmem:[#allocation2 + $0x98] sm:$0xff]
        %v1395 = vld [vmem:[#allocation2 + $0xa0] sm:$0xff]
        %v1396 = vld [vmem:[#allocation2 + $0xa8] sm:$0xff]
        %v1397 = vld [vmem:[#allocation2 + $0xb0] sm:$0xff]
        %v1398 = vld [vmem:[#allocation2 + $0xb8] sm:$0xff]
        %v1399 = vld [vmem:[#allocation2 + $0xc0] sm:$0xff]
        %v1400 = vld [vmem:[#allocation2 + $0xc8] sm:$0xff]
        %v1401 = vld [vmem:[#allocation2 + $0xd0] sm:$0xff]
        %v1402 = vld [vmem:[#allocation2 + $0xd8] sm:$0xff]
        %v1403 = vld [vmem:[#allocation2 + $0xe0] sm:$0xff]
        %v1404 = vld [vmem:[#allocation2 + $0xe8] sm:$0xff]
        %v1405 = vld [vmem:[#allocation2 + $0xf0] sm:$0xff]
        %v1406 = vld [vmem:[#allocation2 + $0xf8] sm:$0xff]
        %v1407 = vld [vmem:[#allocation2 + $0x100] sm:$0xff]
        %v1408 = vld [vmem:[#allocation2 + $0x108] sm:$0xff]
        %v1409 = vld [vmem:[#allocation2 + $0x110] sm:$0xff]
        %v1410 = vld [vmem:[#allocation2 + $0x118] sm:$0xff]
        %v1411 = vld [vmem:[#allocation2 + $0x120] sm:$0xff]
        %v1412 = vld [vmem:[#allocation2 + $0x128] sm:$0xff]
        %v1413 = vld [vmem:[#allocation2 + $0x130] sm:$0xff]
        %v1414 = vld [vmem:[#allocation2 + $0x138] sm:$0xff]
        %v1415 = vld [vmem:[#allocation2 + $0x140] sm:$0xff]
        %v1416 = vld [vmem:[#allocation2 + $0x148] sm:$0xff]
        %v1417 = vld [vmem:[#allocation2 + $0x150] sm:$0xff]
        %v1418 = vld [vmem:[#allocation2 + $0x158] sm:$0xff]
        %v1419 = vld [vmem:[#allocation2 + $0x160] sm:$0xff]
        %v1420 = vld [vmem:[#allocation2 + $0x168] sm:$0xff]
        %v1421 = vld [vmem:[#allocation2 + $0x170] sm:$0xff]
        %v1422 = vld [vmem:[#allocation2 + $0x178] sm:$0xff]
        %v1423 = vld [vmem:[#allocation2 + $0x180] sm:$0xff]
        %v1424 = vld [vmem:[#allocation2 + $0x188] sm:$0xff]
        %v1425 = vld [vmem:[#allocation2 + $0x190] sm:$0xff]
        %v1426 = vld [vmem:[#allocation2 + $0x198] sm:$0xff]
        %v1427 = vld [vmem:[#allocation2 + $0x1a0] sm:$0xff]
        %v1428 = vld [vmem:[#allocation2 + $0x1a8] sm:$0xff]
        %v1429 = vld [vmem:[#allocation2 + $0x1b0] sm:$0xff]
        %v1430 = vld [vmem:[#allocation2 + $0x1b8] sm:$0xff]
        %v1431 = vld [vmem:[#allocation2 + $0x1c0] sm:$0xff]
        %v1432 = vld [vmem:[#allocation2 + $0x1c8] sm:$0xff]
        %v1433 = vld [vmem:[#allocation2 + $0x1d0] sm:$0xff]
        %v1434 = vld [vmem:[#allocation2 + $0x1d8] sm:$0xff]
        %v1435 = vld [vmem:[#allocation2 + $0x1e0] sm:$0xff]
        %v1436 = vld [vmem:[#allocation2 + $0x1e8] sm:$0xff]
        %v1437 = vld [vmem:[#allocation2 + $0x1f0] sm:$0xff]
        %v1438 = vld [vmem:[#allocation2 + $0x1f8] sm:$0xff]
        %v1439 = vld [vmem:[%s295] sm:$0x1]
        %v1441 = vlaneseq
        %v1442 = vshrl.u32 %v1441, 7
        %v1443 = vsub.s32 0, %v1442
        %v1444 = vrot.slane %v1439, %v1443
        %v1446 = vmul.f32 %v1375, %v1444
        %v1447 = vmul.f32 %v1376, %v1444
        %v1448 = vmul.f32 %v1377, %v1444
        %v1449 = vmul.f32 %v1378, %v1444
        %v1450 = vmul.f32 %v1379, %v1444
        %v1451 = vmul.f32 %v1380, %v1444
        %v1452 = vmul.f32 %v1381, %v1444
        %v1453 = vmul.f32 %v1382, %v1444
        %v1454 = vmul.f32 %v1383, %v1444
        %v1455 = vmul.f32 %v1384, %v1444
        %v1456 = vmul.f32 %v1385, %v1444
        %v1457 = vmul.f32 %v1386, %v1444
        %v1458 = vmul.f32 %v1387, %v1444
        %v1459 = vmul.f32 %v1388, %v1444
        %v1460 = vmul.f32 %v1389, %v1444
        %v1461 = vmul.f32 %v1390, %v1444
        %v1462 = vmul.f32 %v1391, %v1444
        %v1463 = vmul.f32 %v1392, %v1444
        %v1464 = vmul.f32 %v1393, %v1444
        %v1465 = vmul.f32 %v1394, %v1444
        %v1466 = vmul.f32 %v1395, %v1444
        %v1467 = vmul.f32 %v1396, %v1444
        %v1468 = vmul.f32 %v1397, %v1444
        %v1469 = vmul.f32 %v1398, %v1444
        %v1470 = vmul.f32 %v1399, %v1444
        %v1471 = vmul.f32 %v1400, %v1444
        %v1472 = vmul.f32 %v1401, %v1444
        %v1473 = vmul.f32 %v1402, %v1444
        %v1474 = vmul.f32 %v1403, %v1444
        %v1475 = vmul.f32 %v1404, %v1444
        %v1476 = vmul.f32 %v1405, %v1444
        %v1477 = vmul.f32 %v1406, %v1444
        %v1478 = vmul.f32 %v1407, %v1444
        %v1479 = vmul.f32 %v1408, %v1444
        %v1480 = vmul.f32 %v1409, %v1444
        %v1481 = vmul.f32 %v1410, %v1444
        %v1482 = vmul.f32 %v1411, %v1444
        %v1483 = vmul.f32 %v1412, %v1444
        %v1484 = vmul.f32 %v1413, %v1444
        %v1485 = vmul.f32 %v1414, %v1444
        %v1486 = vmul.f32 %v1415, %v1444
        %v1487 = vmul.f32 %v1416, %v1444
        %v1488 = vmul.f32 %v1417, %v1444
        %v1489 = vmul.f32 %v1418, %v1444
        %v1490 = vmul.f32 %v1419, %v1444
        %v1491 = vmul.f32 %v1420, %v1444
        %v1492 = vmul.f32 %v1421, %v1444
        %v1493 = vmul.f32 %v1422, %v1444
        %v1494 = vmul.f32 %v1423, %v1444
        %v1495 = vmul.f32 %v1424, %v1444
        %v1496 = vmul.f32 %v1425, %v1444
        %v1497 = vmul.f32 %v1426, %v1444
        %v1498 = vmul.f32 %v1427, %v1444
        %v1499 = vmul.f32 %v1428, %v1444
        %v1500 = vmul.f32 %v1429, %v1444
        %v1501 = vmul.f32 %v1430, %v1444
        %v1502 = vmul.f32 %v1431, %v1444
        %v1503 = vmul.f32 %v1432, %v1444
        %v1504 = vmul.f32 %v1433, %v1444
        %v1505 = vmul.f32 %v1434, %v1444
        %v1506 = vmul.f32 %v1435, %v1444
        %v1507 = vmul.f32 %v1436, %v1444
        %v1508 = vmul.f32 %v1437, %v1444
        %v1509 = vmul.f32 %v1438, %v1444
        %v1510 = vld [vmem:[%s298] sm:$0x1]
        %v1512 = vlaneseq
        %v1513 = vshrl.u32 %v1512, 7
        %v1514 = vsub.s32 0, %v1513
        %v1515 = vrot.slane %v1510, %v1514
        %v1517 = vadd.f32 %v1446, %v1515
        %v1518 = vadd.f32 %v1447, %v1515
        %v1519 = vadd.f32 %v1448, %v1515
        %v1520 = vadd.f32 %v1449, %v1515
        %v1521 = vadd.f32 %v1450, %v1515
        %v1522 = vadd.f32 %v1451, %v1515
        %v1523 = vadd.f32 %v1452, %v1515
        %v1524 = vadd.f32 %v1453, %v1515
        %v1525 = vadd.f32 %v1454, %v1515
        %v1526 = vadd.f32 %v1455, %v1515
        %v1527 = vadd.f32 %v1456, %v1515
        %v1528 = vadd.f32 %v1457, %v1515
        %v1529 = vadd.f32 %v1458, %v1515
        %v1530 = vadd.f32 %v1459, %v1515
        %v1531 = vadd.f32 %v1460, %v1515
        %v1532 = vadd.f32 %v1461, %v1515
        %v1533 = vadd.f32 %v1462, %v1515
        %v1534 = vadd.f32 %v1463, %v1515
        %v1535 = vadd.f32 %v1464, %v1515
        %v1536 = vadd.f32 %v1465, %v1515
        %v1537 = vadd.f32 %v1466, %v1515
        %v1538 = vadd.f32 %v1467, %v1515
        %v1539 = vadd.f32 %v1468, %v1515
        %v1540 = vadd.f32 %v1469, %v1515
        %v1541 = vadd.f32 %v1470, %v1515
        %v1542 = vadd.f32 %v1471, %v1515
        %v1543 = vadd.f32 %v1472, %v1515
        %v1544 = vadd.f32 %v1473, %v1515
        %v1545 = vadd.f32 %v1474, %v1515
        %v1546 = vadd.f32 %v1475, %v1515
        %v1547 = vadd.f32 %v1476, %v1515
        %v1548 = vadd.f32 %v1477, %v1515
        %v1549 = vadd.f32 %v1478, %v1515
        %v1550 = vadd.f32 %v1479, %v1515
        %v1551 = vadd.f32 %v1480, %v1515
        %v1552 = vadd.f32 %v1481, %v1515
        %v1553 = vadd.f32 %v1482, %v1515
        %v1554 = vadd.f32 %v1483, %v1515
        %v1555 = vadd.f32 %v1484, %v1515
        %v1556 = vadd.f32 %v1485, %v1515
        %v1557 = vadd.f32 %v1486, %v1515
        %v1558 = vadd.f32 %v1487, %v1515
        %v1559 = vadd.f32 %v1488, %v1515
        %v1560 = vadd.f32 %v1489, %v1515
        %v1561 = vadd.f32 %v1490, %v1515
        %v1562 = vadd.f32 %v1491, %v1515
        %v1563 = vadd.f32 %v1492, %v1515
        %v1564 = vadd.f32 %v1493, %v1515
        %v1565 = vadd.f32 %v1494, %v1515
        %v1566 = vadd.f32 %v1495, %v1515
        %v1567 = vadd.f32 %v1496, %v1515
        %v1568 = vadd.f32 %v1497, %v1515
        %v1569 = vadd.f32 %v1498, %v1515
        %v1570 = vadd.f32 %v1499, %v1515
        %v1571 = vadd.f32 %v1500, %v1515
        %v1572 = vadd.f32 %v1501, %v1515
        %v1573 = vadd.f32 %v1502, %v1515
        %v1574 = vadd.f32 %v1503, %v1515
        %v1575 = vadd.f32 %v1504, %v1515
        %v1576 = vadd.f32 %v1505, %v1515
        %v1577 = vadd.f32 %v1506, %v1515
        %v1578 = vadd.f32 %v1507, %v1515
        %v1579 = vadd.f32 %v1508, %v1515
        %v1580 = vadd.f32 %v1509, %v1515
        %v1581 = vmax.f32 %v1517, 0.0
        %v1582 = vmax.f32 %v1518, 0.0
        %v1583 = vmax.f32 %v1519, 0.0
        %v1584 = vmax.f32 %v1520, 0.0
        %v1585 = vmax.f32 %v1521, 0.0
        %v1586 = vmax.f32 %v1522, 0.0
        %v1587 = vmax.f32 %v1523, 0.0
        %v1588 = vmax.f32 %v1524, 0.0
        %v1589 = vmax.f32 %v1525, 0.0
        %v1590 = vmax.f32 %v1526, 0.0
        %v1591 = vmax.f32 %v1527, 0.0
        %v1592 = vmax.f32 %v1528, 0.0
        %v1593 = vmax.f32 %v1529, 0.0
        %v1594 = vmax.f32 %v1530, 0.0
        %v1595 = vmax.f32 %v1531, 0.0
        %v1596 = vmax.f32 %v1532, 0.0
        %v1597 = vmax.f32 %v1533, 0.0
        %v1598 = vmax.f32 %v1534, 0.0
        %v1599 = vmax.f32 %v1535, 0.0
        %v1600 = vmax.f32 %v1536, 0.0
        %v1601 = vmax.f32 %v1537, 0.0
        %v1602 = vmax.f32 %v1538, 0.0
        %v1603 = vmax.f32 %v1539, 0.0
        %v1604 = vmax.f32 %v1540, 0.0
        %v1605 = vmax.f32 %v1541, 0.0
        %v1606 = vmax.f32 %v1542, 0.0
        %v1607 = vmax.f32 %v1543, 0.0
        %v1608 = vmax.f32 %v1544, 0.0
        %v1609 = vmax.f32 %v1545, 0.0
        %v1610 = vmax.f32 %v1546, 0.0
        %v1611 = vmax.f32 %v1547, 0.0
        %v1612 = vmax.f32 %v1548, 0.0
        %v1613 = vmax.f32 %v1549, 0.0
        %v1614 = vmax.f32 %v1550, 0.0
        %v1615 = vmax.f32 %v1551, 0.0
        %v1616 = vmax.f32 %v1552, 0.0
        %v1617 = vmax.f32 %v1553, 0.0
        %v1618 = vmax.f32 %v1554, 0.0
        %v1619 = vmax.f32 %v1555, 0.0
        %v1620 = vmax.f32 %v1556, 0.0
        %v1621 = vmax.f32 %v1557, 0.0
        %v1622 = vmax.f32 %v1558, 0.0
        %v1623 = vmax.f32 %v1559, 0.0
        %v1624 = vmax.f32 %v1560, 0.0
        %v1625 = vmax.f32 %v1561, 0.0
        %v1626 = vmax.f32 %v1562, 0.0
        %v1627 = vmax.f32 %v1563, 0.0
        %v1628 = vmax.f32 %v1564, 0.0
        %v1629 = vmax.f32 %v1565, 0.0
        %v1630 = vmax.f32 %v1566, 0.0
        %v1631 = vmax.f32 %v1567, 0.0
        %v1632 = vmax.f32 %v1568, 0.0
        %v1633 = vmax.f32 %v1569, 0.0
        %v1634 = vmax.f32 %v1570, 0.0
        %v1635 = vmax.f32 %v1571, 0.0
        %v1636 = vmax.f32 %v1572, 0.0
        %v1637 = vmax.f32 %v1573, 0.0
        %v1638 = vmax.f32 %v1574, 0.0
        %v1639 = vmax.f32 %v1575, 0.0
        %v1640 = vmax.f32 %v1576, 0.0
        %v1641 = vmax.f32 %v1577, 0.0
        %v1642 = vmax.f32 %v1578, 0.0
        %v1643 = vmax.f32 %v1579, 0.0
        %v1644 = vmax.f32 %v1580, 0.0
        %v1645 = vpack.c.bf16 %v1582, %v1581
        %v1646 = vpack.c.bf16 %v1584, %v1583
        %v1647 = vpack.c.bf16 %v1586, %v1585
        %v1648 = vpack.c.bf16 %v1588, %v1587
        %v1649 = vpack.c.bf16 %v1590, %v1589
        %v1650 = vpack.c.bf16 %v1592, %v1591
        %v1651 = vpack.c.bf16 %v1594, %v1593
        %v1652 = vpack.c.bf16 %v1596, %v1595
        %v1653 = vpack.c.bf16 %v1598, %v1597
        %v1654 = vpack.c.bf16 %v1600, %v1599
        %v1655 = vpack.c.bf16 %v1602, %v1601
        %v1656 = vpack.c.bf16 %v1604, %v1603
        %v1657 = vpack.c.bf16 %v1606, %v1605
        %v1658 = vpack.c.bf16 %v1608, %v1607
        %v1659 = vpack.c.bf16 %v1610, %v1609
        %v1660 = vpack.c.bf16 %v1612, %v1611
        %v1661 = vpack.c.bf16 %v1614, %v1613
        %v1662 = vpack.c.bf16 %v1616, %v1615
        %v1663 = vpack.c.bf16 %v1618, %v1617
        %v1664 = vpack.c.bf16 %v1620, %v1619
        %v1665 = vpack.c.bf16 %v1622, %v1621
        %v1666 = vpack.c.bf16 %v1624, %v1623
        %v1667 = vpack.c.bf16 %v1626, %v1625
        %v1668 = vpack.c.bf16 %v1628, %v1627
        %v1669 = vpack.c.bf16 %v1630, %v1629
        %v1670 = vpack.c.bf16 %v1632, %v1631
        %v1671 = vpack.c.bf16 %v1634, %v1633
        %v1672 = vpack.c.bf16 %v1636, %v1635
        %v1673 = vpack.c.bf16 %v1638, %v1637
        %v1674 = vpack.c.bf16 %v1640, %v1639
        %v1675 = vpack.c.bf16 %v1642, %v1641
        %v1676 = vpack.c.bf16 %v1644, %v1643
        %v1709 = vunpack.c.l.b16 %v1645
        %v1710 = vunpack.c.h.b16 %v1645
        %v1711 = vunpack.c.l.b16 %v1646
        %v1712 = vunpack.c.h.b16 %v1646
        %v1713 = vunpack.c.l.b16 %v1647
        %v1714 = vunpack.c.h.b16 %v1647
        %v1715 = vunpack.c.l.b16 %v1648
        %v1716 = vunpack.c.h.b16 %v1648
        %v1717 = vunpack.c.l.b16 %v1649
        %v1718 = vunpack.c.h.b16 %v1649
        %v1719 = vunpack.c.l.b16 %v1650
        %v1720 = vunpack.c.h.b16 %v1650
        %v1721 = vunpack.c.l.b16 %v1651
        %v1722 = vunpack.c.h.b16 %v1651
        %v1723 = vunpack.c.l.b16 %v1652
        %v1724 = vunpack.c.h.b16 %v1652
        %v1725 = vunpack.c.l.b16 %v1653
        %v1726 = vunpack.c.h.b16 %v1653
        %v1727 = vunpack.c.l.b16 %v1654
        %v1728 = vunpack.c.h.b16 %v1654
        %v1729 = vunpack.c.l.b16 %v1655
        %v1730 = vunpack.c.h.b16 %v1655
        %v1731 = vunpack.c.l.b16 %v1656
        %v1732 = vunpack.c.h.b16 %v1656
        %v1733 = vunpack.c.l.b16 %v1657
        %v1734 = vunpack.c.h.b16 %v1657
        %v1735 = vunpack.c.l.b16 %v1658
        %v1736 = vunpack.c.h.b16 %v1658
        %v1737 = vunpack.c.l.b16 %v1659
        %v1738 = vunpack.c.h.b16 %v1659
        %v1739 = vunpack.c.l.b16 %v1660
        %v1740 = vunpack.c.h.b16 %v1660
        %v1741 = vunpack.c.l.b16 %v1661
        %v1742 = vunpack.c.h.b16 %v1661
        %v1743 = vunpack.c.l.b16 %v1662
        %v1744 = vunpack.c.h.b16 %v1662
        %v1745 = vunpack.c.l.b16 %v1663
        %v1746 = vunpack.c.h.b16 %v1663
        %v1747 = vunpack.c.l.b16 %v1664
        %v1748 = vunpack.c.h.b16 %v1664
        %v1749 = vunpack.c.l.b16 %v1665
        %v1750 = vunpack.c.h.b16 %v1665
        %v1751 = vunpack.c.l.b16 %v1666
        %v1752 = vunpack.c.h.b16 %v1666
        %v1753 = vunpack.c.l.b16 %v1667
        %v1754 = vunpack.c.h.b16 %v1667
        %v1755 = vunpack.c.l.b16 %v1668
        %v1756 = vunpack.c.h.b16 %v1668
        %v1757 = vunpack.c.l.b16 %v1669
        %v1758 = vunpack.c.h.b16 %v1669
        %v1759 = vunpack.c.l.b16 %v1670
        %v1760 = vunpack.c.h.b16 %v1670
        %v1761 = vunpack.c.l.b16 %v1671
        %v1762 = vunpack.c.h.b16 %v1671
        %v1763 = vunpack.c.l.b16 %v1672
        %v1764 = vunpack.c.h.b16 %v1672
        %v1765 = vunpack.c.l.b16 %v1673
        %v1766 = vunpack.c.h.b16 %v1673
        %v1767 = vunpack.c.l.b16 %v1674
        %v1768 = vunpack.c.h.b16 %v1674
        %v1769 = vunpack.c.l.b16 %v1675
        %v1770 = vunpack.c.h.b16 %v1675
        %v1771 = vunpack.c.l.b16 %v1676
        %v1772 = vunpack.c.h.b16 %v1676
        %v1773 = vpack.c.b16 %v1709, %v1709
        %v1774 = vpack.c.b16 %v1710, %v1710
        %v1775 = vpack.c.b16 %v1711, %v1711
        %v1776 = vpack.c.b16 %v1712, %v1712
        %v1777 = vpack.c.b16 %v1713, %v1713
        %v1778 = vpack.c.b16 %v1714, %v1714
        %v1779 = vpack.c.b16 %v1715, %v1715
        %v1780 = vpack.c.b16 %v1716, %v1716
        %v1781 = vpack.c.b16 %v1717, %v1717
        %v1782 = vpack.c.b16 %v1718, %v1718
        %v1783 = vpack.c.b16 %v1719, %v1719
        %v1784 = vpack.c.b16 %v1720, %v1720
        %v1785 = vpack.c.b16 %v1721, %v1721
        %v1786 = vpack.c.b16 %v1722, %v1722
        %v1787 = vpack.c.b16 %v1723, %v1723
        %v1788 = vpack.c.b16 %v1724, %v1724
        %v1789 = vpack.c.b16 %v1725, %v1725
        %v1790 = vpack.c.b16 %v1726, %v1726
        %v1791 = vpack.c.b16 %v1727, %v1727
        %v1792 = vpack.c.b16 %v1728, %v1728
        %v1793 = vpack.c.b16 %v1729, %v1729
        %v1794 = vpack.c.b16 %v1730, %v1730
        %v1795 = vpack.c.b16 %v1731, %v1731
        %v1796 = vpack.c.b16 %v1732, %v1732
        %v1797 = vpack.c.b16 %v1733, %v1733
        %v1798 = vpack.c.b16 %v1734, %v1734
        %v1799 = vpack.c.b16 %v1735, %v1735
        %v1800 = vpack.c.b16 %v1736, %v1736
        %v1801 = vpack.c.b16 %v1737, %v1737
        %v1802 = vpack.c.b16 %v1738, %v1738
        %v1803 = vpack.c.b16 %v1739, %v1739
        %v1804 = vpack.c.b16 %v1740, %v1740
        %v1805 = vpack.c.b16 %v1741, %v1741
        %v1806 = vpack.c.b16 %v1742, %v1742
        %v1807 = vpack.c.b16 %v1743, %v1743
        %v1808 = vpack.c.b16 %v1744, %v1744
        %v1809 = vpack.c.b16 %v1745, %v1745
        %v1810 = vpack.c.b16 %v1746, %v1746
        %v1811 = vpack.c.b16 %v1747, %v1747
        %v1812 = vpack.c.b16 %v1748, %v1748
        %v1813 = vpack.c.b16 %v1749, %v1749
        %v1814 = vpack.c.b16 %v1750, %v1750
        %v1815 = vpack.c.b16 %v1751, %v1751
        %v1816 = vpack.c.b16 %v1752, %v1752
        %v1817 = vpack.c.b16 %v1753, %v1753
        %v1818 = vpack.c.b16 %v1754, %v1754
        %v1819 = vpack.c.b16 %v1755, %v1755
        %v1820 = vpack.c.b16 %v1756, %v1756
        %v1821 = vpack.c.b16 %v1757, %v1757
        %v1822 = vpack.c.b16 %v1758, %v1758
        %v1823 = vpack.c.b16 %v1759, %v1759
        %v1824 = vpack.c.b16 %v1760, %v1760
        %v1825 = vpack.c.b16 %v1761, %v1761
        %v1826 = vpack.c.b16 %v1762, %v1762
        %v1827 = vpack.c.b16 %v1763, %v1763
        %v1828 = vpack.c.b16 %v1764, %v1764
        %v1829 = vpack.c.b16 %v1765, %v1765
        %v1830 = vpack.c.b16 %v1766, %v1766
        %v1831 = vpack.c.b16 %v1767, %v1767
        %v1832 = vpack.c.b16 %v1768, %v1768
        %v1833 = vpack.c.b16 %v1769, %v1769
        %v1834 = vpack.c.b16 %v1770, %v1770
        %v1835 = vpack.c.b16 %v1771, %v1771
        %v1836 = vpack.c.b16 %v1772, %v1772
        %vm1901 = vcmask 519168
        %1902 = vst.msk [vmem:[%s306] sm:$0xf] %vm1901, %v1773
        %1903 = vst.msk [vmem:[%s306 + $0x4] sm:$0xf] %vm1901, %v1774
        %1904 = vst.msk [vmem:[%s306 + $0x8] sm:$0xf] %vm1901, %v1775
        %1905 = vst.msk [vmem:[%s306 + $0xc] sm:$0xf] %vm1901, %v1776
        %1906 = vst.msk [vmem:[%s306 + $0x10] sm:$0xf] %vm1901, %v1777
        %1907 = vst.msk [vmem:[%s306 + $0x14] sm:$0xf] %vm1901, %v1778
        %1908 = vst.msk [vmem:[%s306 + $0x18] sm:$0xf] %vm1901, %v1779
        %1909 = vst.msk [vmem:[%s306 + $0x1c] sm:$0xf] %vm1901, %v1780
        %1910 = vst.msk [vmem:[%s306 + $0x20] sm:$0xf] %vm1901, %v1781
        %1911 = vst.msk [vmem:[%s306 + $0x24] sm:$0xf] %vm1901, %v1782
        %1912 = vst.msk [vmem:[%s306 + $0x28] sm:$0xf] %vm1901, %v1783
        %1913 = vst.msk [vmem:[%s306 + $0x2c] sm:$0xf] %vm1901, %v1784
        %1914 = vst.msk [vmem:[%s306 + $0x30] sm:$0xf] %vm1901, %v1785
        %1915 = vst.msk [vmem:[%s306 + $0x34] sm:$0xf] %vm1901, %v1786
        %1916 = vst.msk [vmem:[%s306 + $0x38] sm:$0xf] %vm1901, %v1787
        %1917 = vst.msk [vmem:[%s306 + $0x3c] sm:$0xf] %vm1901, %v1788
        %1918 = vst.msk [vmem:[%s306 + $0x40] sm:$0xf] %vm1901, %v1789
        %1919 = vst.msk [vmem:[%s306 + $0x44] sm:$0xf] %vm1901, %v1790
        %1920 = vst.msk [vmem:[%s306 + $0x48] sm:$0xf] %vm1901, %v1791
        %1921 = vst.msk [vmem:[%s306 + $0x4c] sm:$0xf] %vm1901, %v1792
        %1922 = vst.msk [vmem:[%s306 + $0x50] sm:$0xf] %vm1901, %v1793
        %1923 = vst.msk [vmem:[%s306 + $0x54] sm:$0xf] %vm1901, %v1794
        %1924 = vst.msk [vmem:[%s306 + $0x58] sm:$0xf] %vm1901, %v1795
        %1925 = vst.msk [vmem:[%s306 + $0x5c] sm:$0xf] %vm1901, %v1796
        %1926 = vst.msk [vmem:[%s306 + $0x60] sm:$0xf] %vm1901, %v1797
        %1927 = vst.msk [vmem:[%s306 + $0x64] sm:$0xf] %vm1901, %v1798
        %1928 = vst.msk [vmem:[%s306 + $0x68] sm:$0xf] %vm1901, %v1799
        %1929 = vst.msk [vmem:[%s306 + $0x6c] sm:$0xf] %vm1901, %v1800
        %1930 = vst.msk [vmem:[%s306 + $0x70] sm:$0xf] %vm1901, %v1801
        %1931 = vst.msk [vmem:[%s306 + $0x74] sm:$0xf] %vm1901, %v1802
        %1932 = vst.msk [vmem:[%s306 + $0x78] sm:$0xf] %vm1901, %v1803
        %1933 = vst.msk [vmem:[%s306 + $0x7c] sm:$0xf] %vm1901, %v1804
        %1934 = vst.msk [vmem:[%s306 + $0x80] sm:$0xf] %vm1901, %v1805
        %1935 = vst.msk [vmem:[%s306 + $0x84] sm:$0xf] %vm1901, %v1806
        %1936 = vst.msk [vmem:[%s306 + $0x88] sm:$0xf] %vm1901, %v1807
        %1937 = vst.msk [vmem:[%s306 + $0x8c] sm:$0xf] %vm1901, %v1808
        %1938 = vst.msk [vmem:[%s306 + $0x90] sm:$0xf] %vm1901, %v1809
        %1939 = vst.msk [vmem:[%s306 + $0x94] sm:$0xf] %vm1901, %v1810
        %1940 = vst.msk [vmem:[%s306 + $0x98] sm:$0xf] %vm1901, %v1811
        %1941 = vst.msk [vmem:[%s306 + $0x9c] sm:$0xf] %vm1901, %v1812
        %1942 = vst.msk [vmem:[%s306 + $0xa0] sm:$0xf] %vm1901, %v1813
        %1943 = vst.msk [vmem:[%s306 + $0xa4] sm:$0xf] %vm1901, %v1814
        %1944 = vst.msk [vmem:[%s306 + $0xa8] sm:$0xf] %vm1901, %v1815
        %1945 = vst.msk [vmem:[%s306 + $0xac] sm:$0xf] %vm1901, %v1816
        %1946 = vst.msk [vmem:[%s306 + $0xb0] sm:$0xf] %vm1901, %v1817
        %1947 = vst.msk [vmem:[%s306 + $0xb4] sm:$0xf] %vm1901, %v1818
        %1948 = vst.msk [vmem:[%s306 + $0xb8] sm:$0xf] %vm1901, %v1819
        %1949 = vst.msk [vmem:[%s306 + $0xbc] sm:$0xf] %vm1901, %v1820
        %1950 = vst.msk [vmem:[%s306 + $0xc0] sm:$0xf] %vm1901, %v1821
        %1951 = vst.msk [vmem:[%s306 + $0xc4] sm:$0xf] %vm1901, %v1822
        %1952 = vst.msk [vmem:[%s306 + $0xc8] sm:$0xf] %vm1901, %v1823
        %1953 = vst.msk [vmem:[%s306 + $0xcc] sm:$0xf] %vm1901, %v1824
        %1954 = vst.msk [vmem:[%s306 + $0xd0] sm:$0xf] %vm1901, %v1825
        %1955 = vst.msk [vmem:[%s306 + $0xd4] sm:$0xf] %vm1901, %v1826
        %1956 = vst.msk [vmem:[%s306 + $0xd8] sm:$0xf] %vm1901, %v1827
        %1957 = vst.msk [vmem:[%s306 + $0xdc] sm:$0xf] %vm1901, %v1828
        %1958 = vst.msk [vmem:[%s306 + $0xe0] sm:$0xf] %vm1901, %v1829
        %1959 = vst.msk [vmem:[%s306 + $0xe4] sm:$0xf] %vm1901, %v1830
        %1960 = vst.msk [vmem:[%s306 + $0xe8] sm:$0xf] %vm1901, %v1831
        %1961 = vst.msk [vmem:[%s306 + $0xec] sm:$0xf] %vm1901, %v1832
        %1962 = vst.msk [vmem:[%s306 + $0xf0] sm:$0xf] %vm1901, %v1833
        %1963 = vst.msk [vmem:[%s306 + $0xf4] sm:$0xf] %vm1901, %v1834
        %1964 = vst.msk [vmem:[%s306 + $0xf8] sm:$0xf] %vm1901, %v1835
        %1965 = vst.msk [vmem:[%s306 + $0xfc] sm:$0xf] %vm1901, %v1836
      $region44: #{_stem.3} parent=35 // pred_fallthru
        _
      %s1966 = smul.u32 64, %s20
      %p1967 = scmp.lt.s32.totalorder %s1966, 255
      %s1968 = scalar_select %p1967, %s1966, 255
      %p1969 = scmp.lt.s32.totalorder %s21, 0
      %s1970 = scalar_select %p1969, %s21, 0
      %s1971 = sadd.s32 %s1970, %s1968
      %s1972 = smul.addr %s1971, 4
      %s1973 = scalar_lea.vmem %s4, %s1972
      // Predicated region
      $region45: #{_stem.3} parent=35 // pred_check
        %p1974 = pneg %p162
      $region46: #{_stem.3} parent=35 // pred_check_branch
        %1976 = sbr.rel (%p1974) target = $region48
      $region47: #{_stem.3} parent=35 // pred_region
        %s1977 = smul.u32 64, %s20
      $region48: #{_stem.3} parent=35 // pred_fallthru
        _
    $region36: #{_stem.3} parent=5 // pred_fallthru
      _
    %p1978 = scmp.le.s32.totalorder 2, %s10
    // Predicated region
    $region49: #{_stem.3} parent=5 // pred_check
      %p1979 = pneg %p1978
    $region50: #{_stem.3} parent=5 // pred_check_branch
      %1981 = sbr.rel (%p1979) target = $region52
    $region51: #{_stem.3} parent=5 // pred_region
      %s1982 = ssub.s32 %s10, 2
      // Predicated region
      $region53: #{_stem.3} parent=51 // pred_check
        %p1983 = pneg %p168
      $region54: #{_stem.3} parent=51 // pred_check_branch
        %1985 = sbr.rel (%p1983) target = $region56
      $region55: #{_stem.3} parent=51 // pred_region
        %s1986 = smul.u32 64, %s23
        %p1987 = scmp.lt.s32.totalorder %s1986, 255
        %s1988 = scalar_select %p1987, %s1986, 255
        %p1989 = scmp.lt.s32.totalorder %s24, 0
        %s1990 = scalar_select %p1989, %s24, 0
        %s1991 = sadd.s32 %s1990, %s1988
        %s1992 = smul.addr %s1991, 4
        %s1993 = scalar_lea.vmem %s4, %s1992
      $region56: #{_stem.3} parent=51 // pred_fallthru
        _
    $region52: #{_stem.3} parent=5 // pred_fallthru
      _
  $region6: #{_stem.3} parent=0 // loop_footer
    %s14 = sadd.s32 1, %s10
  $region7: #{_stem.3} parent=0 // loop_footer_branch
    %9 = sbr.rel target = $region3
  $region8: #{_stem.3} parent=0 // loop_exit
    _

// kernel: _stem.5
$region0: #{_stem.5}
  #allocation0 [shape = 'u32[]', space=smem, size = 0x4, offset = 0x4, fixed_abs, tag = 'smem constant byte address 0x4 - core index']
  #allocation1 [shape = 'u32[144,128]{1,0:T(1,128)}', space=vmem, size = 0x12000, scoped, tag = 'internal scratch']
  %s0 = inlined_call_operand.vmem [shape: bf16[32,1024], index: 0, kind: input, shape index: {}]
  %s1 = inlined_call_operand.vmem [shape: bf16[32,1024], index: 1, kind: input, shape index: {}]
  %s2 = inlined_call_operand.vmem [shape: bf16[32,1024], index: 2, kind: input, shape index: {}]
  %s3 = inlined_call_operand.vmem [shape: bf16[32,1024], index: 3, kind: output, shape index: {}]
  %s4 = sld [smem:[#allocation0]]
  $region45: #{_stem.5} parent=0
    _
  %s6 = ssub.s32 1, %s4
  %s7 = scalar_select 0, %s6, %s4
  loop: start=0, step=1, limit=4
  $region2: #{_stem.5} parent=0 // loop_pre_header
    _
  $region3: #{_stem.5} parent=0 // loop_header
    %s9 = sphi 0, %s13
    %p10 = scmp.ge.s32.totalorder %s9, 4
    %s19 = sphi 0, %s21
    %s22 = sphi 0, %s19
    %s23 = sphi 0, %s22
    %s39 = sphi 0, %s23
    %s45 = sphi 0, %s47
    %s48 = sphi 0, %s45
    %s49 = sphi 0, %s48
    %s65 = sphi 0, %s49
    %s71 = sphi 0, %s73
    %s74 = sphi 0, %s71
    %s75 = sphi 0, %s74
    %s91 = sphi 0, %s75
    %s97 = sphi 0, %s99
    %s100 = sphi 0, %s97
    %s101 = sphi 0, %s100
    %s117 = sphi 0, %s101
  $region4: #{_stem.5} parent=0 // loop_header_branch
    %12 = sbr.rel (%p10) target = $region8
  $region5: #{_stem.5} parent=0 // loop_body
    %s14 = ssub.s32 %s9, 1
    %s15 = ssub.s32 %s9, 2
    %s16 = sadd.s32 %s9, 1
    %s17 = ssub.s32 %s9, %s16
    %p18 = scmp.eq.s32.totalorder %s17, 0
    %s20 = sadd.s32 %s19, 1
    %s21 = scalar_select %p18, %s19, %s20
    %p24 = pneg %p18
    %p25 = scmp.eq.s32.totalorder %s9, 1
    %p26 = por %p24, %p25
    %p27 = scmp.ne.s32.totalorder %s19, %s22
    %p28 = scmp.eq.s32.totalorder %s9, 0
    %p29 = por %p27, %p28
    %p30 = scmp.ne.s32.totalorder %s19, %s22
    %p31 = scmp.eq.s32.totalorder %s14, 1
    %p32 = por %p30, %p31
    %p33 = scmp.ne.s32.totalorder %s22, %s23
    %p34 = scmp.eq.s32.totalorder %s14, 0
    %p35 = por %p33, %p34
    %p36 = scmp.ne.s32.totalorder %s22, %s23
    %p37 = scmp.eq.s32.totalorder %s15, 1
    %p38 = por %p36, %p37
    %p40 = scmp.ne.s32.totalorder %s23, %s39
    %p41 = scmp.eq.s32.totalorder %s15, 0
    %p42 = por %p40, %p41
    %s43 = ssub.s32 %s9, %s16
    %p44 = scmp.eq.s32.totalorder %s43, 0
    %s46 = sadd.s32 %s45, 1
    %s47 = scalar_select %p44, %s45, %s46
    %p50 = pneg %p44
    %p51 = scmp.eq.s32.totalorder %s9, 1
    %p52 = por %p50, %p51
    %p53 = scmp.ne.s32.totalorder %s45, %s48
    %p54 = scmp.eq.s32.totalorder %s9, 0
    %p55 = por %p53, %p54
    %p56 = scmp.ne.s32.totalorder %s45, %s48
    %p57 = scmp.eq.s32.totalorder %s14, 1
    %p58 = por %p56, %p57
    %p59 = scmp.ne.s32.totalorder %s48, %s49
    %p60 = scmp.eq.s32.totalorder %s14, 0
    %p61 = por %p59, %p60
    %p62 = scmp.ne.s32.totalorder %s48, %s49
    %p63 = scmp.eq.s32.totalorder %s15, 1
    %p64 = por %p62, %p63
    %p66 = scmp.ne.s32.totalorder %s49, %s65
    %p67 = scmp.eq.s32.totalorder %s15, 0
    %p68 = por %p66, %p67
    %s69 = ssub.s32 %s9, %s16
    %p70 = scmp.eq.s32.totalorder %s69, 0
    %s72 = sadd.s32 %s71, 1
    %s73 = scalar_select %p70, %s71, %s72
    %p76 = pneg %p70
    %p77 = scmp.eq.s32.totalorder %s9, 1
    %p78 = por %p76, %p77
    %p79 = scmp.ne.s32.totalorder %s71, %s74
    %p80 = scmp.eq.s32.totalorder %s9, 0
    %p81 = por %p79, %p80
    %p82 = scmp.ne.s32.totalorder %s71, %s74
    %p83 = scmp.eq.s32.totalorder %s14, 1
    %p84 = por %p82, %p83
    %p85 = scmp.ne.s32.totalorder %s74, %s75
    %p86 = scmp.eq.s32.totalorder %s14, 0
    %p87 = por %p85, %p86
    %p88 = scmp.ne.s32.totalorder %s74, %s75
    %p89 = scmp.eq.s32.totalorder %s15, 1
    %p90 = por %p88, %p89
    %p92 = scmp.ne.s32.totalorder %s75, %s91
    %p93 = scmp.eq.s32.totalorder %s15, 0
    %p94 = por %p92, %p93
    %s95 = ssub.s32 %s9, %s16
    %p96 = scmp.eq.s32.totalorder %s95, 0
    %s98 = sadd.s32 %s97, 1
    %s99 = scalar_select %p96, %s97, %s98
    %p102 = pneg %p96
    %p103 = scmp.eq.s32.totalorder %s9, 1
    %p104 = por %p102, %p103
    %p105 = scmp.ne.s32.totalorder %s97, %s100
    %p106 = scmp.eq.s32.totalorder %s9, 0
    %p107 = por %p105, %p106
    %p108 = scmp.ne.s32.totalorder %s97, %s100
    %p109 = scmp.eq.s32.totalorder %s14, 1
    %p110 = por %p108, %p109
    %p111 = scmp.ne.s32.totalorder %s100, %s101
    %p112 = scmp.eq.s32.totalorder %s14, 0
    %p113 = por %p111, %p112
    %p114 = scmp.ne.s32.totalorder %s100, %s101
    %p115 = scmp.eq.s32.totalorder %s15, 1
    %p116 = por %p114, %p115
    %p118 = scmp.ne.s32.totalorder %s101, %s117
    %p119 = scmp.eq.s32.totalorder %s15, 0
    %p120 = por %p118, %p119
    %p121 = scmp.le.s32.totalorder 1, %s9
    %p122 = scmp.lt.s32.totalorder %s9, 3
    %p123 = pnand %p121, %p122
    %p124 = pneg %p123
    // Predicated region
    $region9: #{_stem.5} parent=5 // pred_check
      _
    $region10: #{_stem.5} parent=5 // pred_check_branch
      %126 = sbr.rel (%p123) target = $region12
    $region11: #{_stem.5} parent=5 // pred_region
      %s127 = ssub.s32 %s9, 1
    $region12: #{_stem.5} parent=5 // pred_fallthru
      _
    %p128 = scmp.lt.s32.totalorder %s9, 2
    // Predicated region
    $region13: #{_stem.5} parent=5 // pred_check
      %p129 = pneg %p128
    $region14: #{_stem.5} parent=5 // pred_check_branch
      %131 = sbr.rel (%p129) target = $region16
    $region15: #{_stem.5} parent=5 // pred_region
      // Predicated region
      $region17: #{_stem.5} parent=15 // pred_check
        %p132 = pneg %p29
      $region18: #{_stem.5} parent=15 // pred_check_branch
        %134 = sbr.rel (%p132) target = $region20
      $region19: #{_stem.5} parent=15 // pred_region
        %s135 = smul.u32 2, %s9
        %p136 = scmp.lt.s32.totalorder %s135, 3
        %s137 = scalar_select %p136, %s135, 3
        %s138 = smul.addr %s137, 8
        %s139 = smul.addr %s138, 4
        %s140 = scalar_lea.vmem %s0, %s139
        %s141 = smul.u32 2, %s9
      $region20: #{_stem.5} parent=15 // pred_fallthru
        _
      // Predicated region
      $region21: #{_stem.5} parent=15 // pred_check
        %p142 = pneg %p55
      $region22: #{_stem.5} parent=15 // pred_check_branch
        %144 = sbr.rel (%p142) target = $region24
      $region23: #{_stem.5} parent=15 // pred_region
        %s145 = smul.u32 2, %s9
        %p146 = scmp.lt.s32.totalorder %s145, 3
        %s147 = scalar_select %p146, %s145, 3
        %s148 = smul.addr %s147, 8
        %s149 = smul.addr %s148, 4
        %s150 = scalar_lea.vmem %s1, %s149
        %s151 = smul.u32 2, %s9
      $region24: #{_stem.5} parent=15 // pred_fallthru
        _
      // Predicated region
      $region25: #{_stem.5} parent=15 // pred_check
        %p152 = pneg %p81
      $region26: #{_stem.5} parent=15 // pred_check_branch
        %154 = sbr.rel (%p152) target = $region28
      $region27: #{_stem.5} parent=15 // pred_region
        %s155 = smul.u32 2, %s9
        %p156 = scmp.lt.s32.totalorder %s155, 3
        %s157 = scalar_select %p156, %s155, 3
        %s158 = smul.addr %s157, 8
        %s159 = smul.addr %s158, 4
        %s160 = scalar_lea.vmem %s2, %s159
        %s161 = smul.u32 2, %s9
      $region28: #{_stem.5} parent=15 // pred_fallthru
        _
    $region16: #{_stem.5} parent=5 // pred_fallthru
      _
    %p162 = scmp.le.s32.totalorder 1, %s9
    %p163 = scmp.lt.s32.totalorder %s9, 3
    %p164 = pnand %p162, %p163
    %p165 = pneg %p164
    // Predicated region
    $region29: #{_stem.5} parent=5 // pred_check
      _
    $region30: #{_stem.5} parent=5 // pred_check_branch
      %167 = sbr.rel (%p164) target = $region32
    $region31: #{_stem.5} parent=5 // pred_region
      %s168 = ssub.s32 %s9, 1
      %s169 = smul.u32 2, %s14
      %p170 = scmp.lt.s32.totalorder %s169, 3
      %s171 = scalar_select %p170, %s169, 3
      %s172 = smul.addr %s171, 8
      %s173 = smul.addr %s172, 4
      %s174 = scalar_lea.vmem %s0, %s173
      %p175 = pneg %p35
      %p176 = pneg %p32
      %s177 = smul.u32 2, %s14
      %p178 = scmp.lt.s32.totalorder %s177, 3
      %s179 = scalar_select %p178, %s177, 3
      %s180 = smul.addr %s179, 8
      %s181 = smul.addr %s180, 4
      %s182 = scalar_lea.vmem %s1, %s181
      %p183 = pneg %p61
      %p184 = pneg %p58
      %s185 = smul.u32 2, %s14
      %p186 = scmp.lt.s32.totalorder %s185, 3
      %s187 = scalar_select %p186, %s185, 3
      %s188 = smul.addr %s187, 8
      %s189 = smul.addr %s188, 4
      %s190 = scalar_lea.vmem %s2, %s189
      %p191 = pneg %p87
      %p192 = pneg %p84
      %p193 = pneg %p113
      %p194 = pneg %p110
      %s195 = smul.u32 2, %s14
      %p196 = scmp.lt.s32.totalorder %s195, 3
      %s197 = scalar_select %p196, %s195, 3
      %s198 = smul.addr %s197, 8
      %s199 = smul.addr %s198, 4
      %s200 = scalar_lea.vmem %s3, %s199
      %s201 = smul.u32 2, %s14
      %p202 = scmp.lt.s32.totalorder %s201, 3
      %s203 = scalar_select %p202, %s201, 3
      %s204 = smul.addr %s203, 8
      %s205 = smul.addr %s204, 4
      %s206 = scalar_lea.vmem %s0, %s205
      %s207 = smul.u32 2, %s14
      %s208 = smul.u32 2, %s14
      %p209 = scmp.lt.s32.totalorder %s208, 3
      %s210 = scalar_select %p209, %s208, 3
      %s211 = smul.addr %s210, 8
      %s212 = smul.addr %s211, 4
      %s213 = scalar_lea.vmem %s1, %s212
      %s214 = smul.u32 2, %s14
      %s215 = smul.u32 2, %s14
      %p216 = scmp.lt.s32.totalorder %s215, 3
      %s217 = scalar_select %p216, %s215, 3
      %s218 = smul.addr %s217, 8
      %s219 = smul.addr %s218, 4
      %s220 = scalar_lea.vmem %s2, %s219
      %s221 = smul.u32 2, %s14
      %s222 = smul.u32 2, %s14
      %p223 = scmp.lt.s32.totalorder %s222, 3
      %s224 = scalar_select %p223, %s222, 3
      %s225 = smul.addr %s224, 8
      %s226 = smul.addr %s225, 4
      %s227 = scalar_lea.vmem %s3, %s226
      %s228 = smul.u32 2, %s14
      %v229 = vld [vmem:[%s206] sm:$0xff]
      %v230 = vld [vmem:[%s206 + $0x8] sm:$0xff]
      %v231 = vld [vmem:[%s206 + $0x10] sm:$0xff]
      %v232 = vld [vmem:[%s206 + $0x18] sm:$0xff]
      %v233 = vld [vmem:[%s206 + $0x20] sm:$0xff]
      %v234 = vld [vmem:[%s206 + $0x28] sm:$0xff]
      %v235 = vld [vmem:[%s206 + $0x30] sm:$0xff]
      %v236 = vld [vmem:[%s206 + $0x38] sm:$0xff]
      %v237 = vld [vmem:[%s213] sm:$0xff]
      %v238 = vld [vmem:[%s213 + $0x8] sm:$0xff]
      %v239 = vld [vmem:[%s213 + $0x10] sm:$0xff]
      %v240 = vld [vmem:[%s213 + $0x18] sm:$0xff]
      %v241 = vld [vmem:[%s213 + $0x20] sm:$0xff]
      %v242 = vld [vmem:[%s213 + $0x28] sm:$0xff]
      %v243 = vld [vmem:[%s213 + $0x30] sm:$0xff]
      %v244 = vld [vmem:[%s213 + $0x38] sm:$0xff]
      %v245 = vmax.bf16 %v229, %v237
      %v246 = vmax.bf16 %v230, %v238
      %v247 = vmax.bf16 %v231, %v239
      %v248 = vmax.bf16 %v232, %v240
      %v249 = vmax.bf16 %v233, %v241
      %v250 = vmax.bf16 %v234, %v242
      %v251 = vmax.bf16 %v235, %v243
      %v252 = vmax.bf16 %v236, %v244
      %v253 = vld [vmem:[%s220] sm:$0xff]
      %v254 = vld [vmem:[%s220 + $0x8] sm:$0xff]
      %v255 = vld [vmem:[%s220 + $0x10] sm:$0xff]
      %v256 = vld [vmem:[%s220 + $0x18] sm:$0xff]
      %v257 = vld [vmem:[%s220 + $0x20] sm:$0xff]
      %v258 = vld [vmem:[%s220 + $0x28] sm:$0xff]
      %v259 = vld [vmem:[%s220 + $0x30] sm:$0xff]
      %v260 = vld [vmem:[%s220 + $0x38] sm:$0xff]
      %v261 = vmax.bf16 %v245, %v253
      %v262 = vmax.bf16 %v246, %v254
      %v263 = vmax.bf16 %v247, %v255
      %v264 = vmax.bf16 %v248, %v256
      %v265 = vmax.bf16 %v249, %v257
      %v266 = vmax.bf16 %v250, %v258
      %v267 = vmax.bf16 %v251, %v259
      %v268 = vmax.bf16 %v252, %v260
      %269 = vst [vmem:[%s227] sm:$0xff] %v261
      %270 = vst [vmem:[%s227 + $0x8] sm:$0xff] %v262
      %271 = vst [vmem:[%s227 + $0x10] sm:$0xff] %v263
      %272 = vst [vmem:[%s227 + $0x18] sm:$0xff] %v264
      %273 = vst [vmem:[%s227 + $0x20] sm:$0xff] %v265
      %274 = vst [vmem:[%s227 + $0x28] sm:$0xff] %v266
      %275 = vst [vmem:[%s227 + $0x30] sm:$0xff] %v267
      %276 = vst [vmem:[%s227 + $0x38] sm:$0xff] %v268
      %s277 = smul.u32 2, %s14
      %p278 = scmp.lt.s32.totalorder %s277, 3
      %s279 = scalar_select %p278, %s277, 3
      %s280 = smul.addr %s279, 8
      %s281 = smul.addr %s280, 4
      %s282 = scalar_lea.vmem %s3, %s281
      // Predicated region
      $region33: #{_stem.5} parent=31 // pred_check
        %p283 = pneg %p110
      $region34: #{_stem.5} parent=31 // pred_check_branch
        %285 = sbr.rel (%p283) target = $region36
      $region35: #{_stem.5} parent=31 // pred_region
        %s286 = smul.u32 2, %s14
      $region36: #{_stem.5} parent=31 // pred_fallthru
        _
    $region32: #{_stem.5} parent=5 // pred_fallthru
      _
    %p287 = scmp.le.s32.totalorder 2, %s9
    // Predicated region
    $region37: #{_stem.5} parent=5 // pred_check
      %p288 = pneg %p287
    $region38: #{_stem.5} parent=5 // pred_check_branch
      %290 = sbr.rel (%p288) target = $region40
    $region39: #{_stem.5} parent=5 // pred_region
      %s291 = ssub.s32 %s9, 2
      // Predicated region
      $region41: #{_stem.5} parent=39 // pred_check
        %p292 = pneg %p116
      $region42: #{_stem.5} parent=39 // pred_check_branch
        %294 = sbr.rel (%p292) target = $region44
      $region43: #{_stem.5} parent=39 // pred_region
        %s295 = smul.u32 2, %s15
        %p296 = scmp.lt.s32.totalorder %s295, 3
        %s297 = scalar_select %p296, %s295, 3
        %s298 = smul.addr %s297, 8
        %s299 = smul.addr %s298, 4
        %s300 = scalar_lea.vmem %s3, %s299
      $region44: #{_stem.5} parent=39 // pred_fallthru
        _
    $region40: #{_stem.5} parent=5 // pred_fallthru
      _
  $region6: #{_stem.5} parent=0 // loop_footer
    %s13 = sadd.s32 1, %s9
  $region7: #{_stem.5} parent=0 // loop_footer_branch
    %8 = sbr.rel target = $region3
  $region8: #{_stem.5} parent=0 // loop_exit
    _

</llo_original>
